<compile_context>
chip_gen: v7x
topology: tpu7x:2x2x1
jax: 0.10.0
libtpu: 0.0.40
codegen_flags: <defaults>
</compile_context>

<pallas_src>
from functools import partial

import jax
import jax.numpy as jnp
from jax.experimental import pallas as pl
from jax.experimental.pallas import tpu as pltpu


# --------------------------- fused LSTM + MLP kernel -------------------------
def _lstm_direct_kernel(x_ref, wih_ref, whh_ref, b_ref,
                        w1_ref, b1_ref, w2_ref, b2_ref,
                        w3_ref, b3_ref, w4_ref, b4_ref,
                        packed_ref,
                        *, num_layers, hidden, seq_len):
    f32 = jnp.float32
    B = x_ref.shape[0]
    T = seq_len
    H = hidden

    # Layer-0 input rearranged time-major (T*B, H) from per-step slices
    # (register resident; no scratch buffer, done once outside the recurrence).
    layer_in = jnp.concatenate(
        [x_ref[:, t, :].astype(f32) for t in range(T)], axis=0)      # (T*B, H)

    h_last = None                 # last layer's per-step h values (time order)
    hc_parts = []                 # [h_l, c_l] per layer, lane-concatenated later

    for l in range(num_layers):
        wih = wih_ref[l]          # (H, 4H)   pre-transposed, g-cols pre-scaled x2
        whh = whh_ref[l]          # (H, 4H)   pre-transposed, g-cols pre-scaled x2
        b = b_ref[l]              # (1, 4H)   pre-summed bih + bhh, g slice x2

        # Hoisted input-side matmul: ONE (T*B, H)@(H, 4H) per layer, time-major,
        # so the per-step slice below is a contiguous sublane slice.
        gx = jnp.dot(layer_in, wih, preferred_element_type=f32) + b  # (T*B, 4H)

        h = jnp.zeros((B, H), f32)
        c = jnp.zeros((B, H), f32)
        h_list = []
        for t in range(T):        # static unroll: T is small & fixed
            gates = gx[t * B:(t + 1) * B, :] + jnp.dot(
                h, whh, preferred_element_type=f32)
            # Single EUP dispatch over the full (B, 4H):
            # g-gate pre-activations were pre-scaled by 2 at init time, so
            # tanh(x) = 2*sigmoid(2x) - 1 comes out of the same sigmoid.
            sg = jax.nn.sigmoid(gates)
            i_g = sg[:, 0:H]                       # PyTorch gate order: i,f,g,o
            f_g = sg[:, H:2 * H]
            g_g = 2.0 * sg[:, 2 * H:3 * H] - 1.0   # == tanh(original g preact)
            o_g = sg[:, 3 * H:4 * H]
            c = f_g * c + i_g * g_g
            h = o_g * jnp.tanh(c)
            h_list.append(h)

        hc_parts.append(h)
        hc_parts.append(c)
        # Register-resident layer output (already time-major) feeds next layer.
        layer_in = jnp.concatenate(h_list, axis=0)                   # (T*B, H)
        if l == num_layers - 1:
            h_last = h_list
        # (inter-layer dropout: eval-mode identity — see TODO at top)

    # Fused flatten + MLP head: flat (B, T*H) lands exactly on 128 lanes and is
    # contracted in ONE K=T*H matmul (no per-step K=16 accumulation).
    flat = jnp.concatenate(h_last, axis=1)                           # (B, T*H)
    z = jnp.maximum(jnp.dot(flat, w1_ref[...], preferred_element_type=f32) + b1_ref[...], 0.0)
    z = jnp.maximum(jnp.dot(z, w2_ref[...], preferred_element_type=f32) + b2_ref[...], 0.0)
    z = jnp.maximum(jnp.dot(z, w3_ref[...], preferred_element_type=f32) + b3_ref[...], 0.0)
    out = jnp.dot(z, w4_ref[...], preferred_element_type=f32) + b4_ref[...]

    # Lane-dense epilogue: one wide row per batch element
    # [ out | h_layer0 | c_layer0 | h_layer1 | c_layer1 | ... ].
    packed_ref[...] = jnp.concatenate([out] + hc_parts, axis=1).astype(packed_ref.dtype)


# ----------------------------- parameters ------------------------------------
def init_params(key, input_features, hidden_dim, output_features, lookback, num_layers=2):
    H = int(input_features)
    hd = int(hidden_dim)
    mlp_dims = [H * int(lookback), hd, hd // 2, hd // 4, int(output_features)]

    keys = iter(jax.random.split(key, num_layers * 4 + (len(mlp_dims) - 1) * 2))
    bound = 1.0 / float(H) ** 0.5            # PyTorch nn.LSTM default uniform bound

    def scale_g(a):
        # Pre-scale the g-gate block by 2 so the kernel can use a single sigmoid
        # (tanh(x) = 2*sigmoid(2x) - 1).  Bit-identical math up to ULP.
        return a.at[..., 2 * H:3 * H].multiply(2.0)

    wih_t = jnp.stack([jax.random.uniform(next(keys), (H, 4 * H), jnp.float32, -bound, bound)
                       for _ in range(num_layers)])   # pre-transposed: (in, 4H)
    whh_t = jnp.stack([jax.random.uniform(next(keys), (H, 4 * H), jnp.float32, -bound, bound)
                       for _ in range(num_layers)])
    bih = jnp.stack([jax.random.uniform(next(keys), (1, 4 * H), jnp.float32, -bound, bound)
                     for _ in range(num_layers)])
    bhh = jnp.stack([jax.random.uniform(next(keys), (1, 4 * H), jnp.float32, -bound, bound)
                     for _ in range(num_layers)])

    mlp = []
    for din, dout in zip(mlp_dims[:-1], mlp_dims[1:]):
        lb = 1.0 / float(din) ** 0.5          # PyTorch nn.Linear default uniform bound
        w = jax.random.uniform(next(keys), (din, dout), jnp.float32, -lb, lb)  # pre-transposed
        bb = jax.random.uniform(next(keys), (1, dout), jnp.float32, -lb, lb)
        mlp.append((w, bb))

    return dict(wih_t=scale_g(wih_t), whh_t=scale_g(whh_t),
                b=scale_g(bih + bhh),          # biases pre-summed, g slice x2
                mlp=mlp)


# ----------------------------- forward wrapper --------------------------------
def lstm_direct_forward(x, params, *, num_layers=2):
    """x: (B, T, F) batch_first, like the PyTorch module (T must equal lookback)."""
    B, T, F = x.shape
    H = F
    (w1, b1), (w2, b2), (w3, b3), (w4, b4) = params["mlp"]
    n_out = w4.shape[1]
    packed_width = n_out + num_layers * 2 * H

    vmem = pl.BlockSpec(memory_space=pltpu.MemorySpace.VMEM)
    packed = pl.pallas_call(
        partial(_lstm_direct_kernel, num_layers=num_layers, hidden=H, seq_len=T),
        out_shape=jax.ShapeDtypeStruct((B, packed_width), jnp.float32),
        in_specs=[vmem] * 12,
        out_specs=vmem,
    )(x.astype(jnp.float32), params["wih_t"], params["whh_t"], params["b"],
      w1, b1, w2, b2, w3, b3, w4, b4)

    out = packed[:, :n_out]
    hn = jnp.stack([packed[:, n_out + (2 * l) * H: n_out + (2 * l + 1) * H]
                    for l in range(num_layers)], axis=0)       # (L, B, H)
    cn = jnp.stack([packed[:, n_out + (2 * l + 1) * H: n_out + (2 * l + 2) * H]
                    for l in range(num_layers)], axis=0)       # (L, B, H)

    # PyTorch reshape: x.reshape(-1, 1, T*H) -> output is (B, 1, out_features).
    return out.reshape(B, 1, n_out), hn, cn


# ----------------------------- demo -------------------------------------------
if __name__ == "__main__":
    input_features = 16
    hidden_dim = 32
    output_features = 4
    lookback = 8            # sequence length must equal lookback (module contract)
    num_layers = 2
    batch = 2

    key = jax.random.PRNGKey(0)
    pkey, xkey = jax.random.split(key)
    params = init_params(pkey, input_features, hidden_dim, output_features,
                         lookback, num_layers)
    x = jax.random.normal(xkey, (batch, lookback, input_features), jnp.float32)

    fwd = jax.jit(partial(lstm_direct_forward, num_layers=num_layers))
    out, hn, cn = fwd(x, params)
    jax.block_until_ready((out, hn, cn))

    assert out.shape == (batch, 1, output_features)
    assert hn.shape == (num_layers, batch, input_features)
    assert cn.shape == (num_layers, batch, input_features)
    assert bool(jnp.all(jnp.isfinite(out)))
    print("KERNEL_OK")
</pallas_src>

<mosaic_0001>
module attributes {stable_mosaic.version = 11 : i64} {
  func.func @_lstm_direct_kernel(%arg0: memref<2x8x16xf32, #tpu.memory_space<vmem>>, %arg1: memref<2x16x64xf32, #tpu.memory_space<vmem>>, %arg2: memref<2x16x64xf32, #tpu.memory_space<vmem>>, %arg3: memref<2x1x64xf32, #tpu.memory_space<vmem>>, %arg4: memref<128x32xf32, #tpu.memory_space<vmem>>, %arg5: memref<1x32xf32, #tpu.memory_space<vmem>>, %arg6: memref<32x16xf32, #tpu.memory_space<vmem>>, %arg7: memref<1x16xf32, #tpu.memory_space<vmem>>, %arg8: memref<16x8xf32, #tpu.memory_space<vmem>>, %arg9: memref<1x8xf32, #tpu.memory_space<vmem>>, %arg10: memref<8x4xf32, #tpu.memory_space<vmem>>, %arg11: memref<1x4xf32, #tpu.memory_space<vmem>>, %arg12: memref<2x68xf32, #tpu.memory_space<vmem>>) attributes {dimension_semantics = [], scalar_prefetch = 0 : i64, scratch_operands = 0 : i64, tpu.core_type = #tpu.core_type<tc>} {
    %c0 = arith.constant 0 : index
    %c0_0 = arith.constant 0 : index
    %c0_1 = arith.constant 0 : index
    %0 = vector.load %arg0[%c0, %c0_0, %c0_1] : memref<2x8x16xf32, #tpu.memory_space<vmem>>, vector<2x1x16xf32>
    %1 = vector.shape_cast %0 : vector<2x1x16xf32> to vector<2x16xf32>
    %c0_2 = arith.constant 0 : index
    %c1 = arith.constant 1 : index
    %c0_3 = arith.constant 0 : index
    %2 = vector.load %arg0[%c0_2, %c1, %c0_3] : memref<2x8x16xf32, #tpu.memory_space<vmem>>, vector<2x1x16xf32>
    %3 = vector.shape_cast %2 : vector<2x1x16xf32> to vector<2x16xf32>
    %c0_4 = arith.constant 0 : index
    %c2 = arith.constant 2 : index
    %c0_5 = arith.constant 0 : index
    %4 = vector.load %arg0[%c0_4, %c2, %c0_5] : memref<2x8x16xf32, #tpu.memory_space<vmem>>, vector<2x1x16xf32>
    %5 = vector.shape_cast %4 : vector<2x1x16xf32> to vector<2x16xf32>
    %c0_6 = arith.constant 0 : index
    %c3 = arith.constant 3 : index
    %c0_7 = arith.constant 0 : index
    %6 = vector.load %arg0[%c0_6, %c3, %c0_7] : memref<2x8x16xf32, #tpu.memory_space<vmem>>, vector<2x1x16xf32>
    %7 = vector.shape_cast %6 : vector<2x1x16xf32> to vector<2x16xf32>
    %c0_8 = arith.constant 0 : index
    %c4 = arith.constant 4 : index
    %c0_9 = arith.constant 0 : index
    %8 = vector.load %arg0[%c0_8, %c4, %c0_9] : memref<2x8x16xf32, #tpu.memory_space<vmem>>, vector<2x1x16xf32>
    %9 = vector.shape_cast %8 : vector<2x1x16xf32> to vector<2x16xf32>
    %c0_10 = arith.constant 0 : index
    %c5 = arith.constant 5 : index
    %c0_11 = arith.constant 0 : index
    %10 = vector.load %arg0[%c0_10, %c5, %c0_11] : memref<2x8x16xf32, #tpu.memory_space<vmem>>, vector<2x1x16xf32>
    %11 = vector.shape_cast %10 : vector<2x1x16xf32> to vector<2x16xf32>
    %c0_12 = arith.constant 0 : index
    %c6 = arith.constant 6 : index
    %c0_13 = arith.constant 0 : index
    %12 = vector.load %arg0[%c0_12, %c6, %c0_13] : memref<2x8x16xf32, #tpu.memory_space<vmem>>, vector<2x1x16xf32>
    %13 = vector.shape_cast %12 : vector<2x1x16xf32> to vector<2x16xf32>
    %c0_14 = arith.constant 0 : index
    %c7 = arith.constant 7 : index
    %c0_15 = arith.constant 0 : index
    %14 = vector.load %arg0[%c0_14, %c7, %c0_15] : memref<2x8x16xf32, #tpu.memory_space<vmem>>, vector<2x1x16xf32>
    %15 = vector.shape_cast %14 : vector<2x1x16xf32> to vector<2x16xf32>
    %16 = tpu.concatenate %1, %3, %5, %7, %9, %11, %13, %15 in 0 : vector<2x16xf32>, vector<2x16xf32>, vector<2x16xf32>, vector<2x16xf32>, vector<2x16xf32>, vector<2x16xf32>, vector<2x16xf32>, vector<2x16xf32> -> vector<16x16xf32>
    %c0_16 = arith.constant 0 : index
    %c0_17 = arith.constant 0 : index
    %c0_18 = arith.constant 0 : index
    %17 = vector.load %arg1[%c0_16, %c0_17, %c0_18] : memref<2x16x64xf32, #tpu.memory_space<vmem>>, vector<1x16x64xf32>
    %18 = vector.shape_cast %17 : vector<1x16x64xf32> to vector<16x64xf32>
    %c0_19 = arith.constant 0 : index
    %c0_20 = arith.constant 0 : index
    %c0_21 = arith.constant 0 : index
    %19 = vector.load %arg2[%c0_19, %c0_20, %c0_21] : memref<2x16x64xf32, #tpu.memory_space<vmem>>, vector<1x16x64xf32>
    %20 = vector.shape_cast %19 : vector<1x16x64xf32> to vector<16x64xf32>
    %c0_22 = arith.constant 0 : index
    %c0_23 = arith.constant 0 : index
    %c0_24 = arith.constant 0 : index
    %21 = vector.load %arg3[%c0_22, %c0_23, %c0_24] : memref<2x1x64xf32, #tpu.memory_space<vmem>>, vector<1x1x64xf32>
    %22 = vector.shape_cast %21 : vector<1x1x64xf32> to vector<1x64xf32>
    %cst = arith.constant dense<0.000000e+00> : vector<16x64xf32>
    %23 = tpu.matmul %16, %18, %cst {dimension_numbers = #tpu.dot_dimension_numbers<[1], [0], [0], [1], [0, 0, 1, 1], [], []>} : vector<16x16xf32>, vector<16x64xf32>, vector<16x64xf32> -> vector<16x64xf32>
    %24 = vector.broadcast %22 : vector<1x64xf32> to vector<16x64xf32>
    %25 = arith.addf %23, %24 : vector<16x64xf32>
    %cst_25 = arith.constant 0.000000e+00 : f32
    %26 = vector.broadcast %cst_25 : f32 to vector<2x16xf32>
    %cst_26 = arith.constant 0.000000e+00 : f32
    %27 = vector.broadcast %cst_26 : f32 to vector<2x16xf32>
    %28 = vector.extract_strided_slice %25 {offsets = [0, 0], sizes = [2, 64], strides = [1, 1]} : vector<16x64xf32> to vector<2x64xf32>
    %cst_27 = arith.constant dense<0.000000e+00> : vector<2x64xf32>
    %29 = tpu.matmul %26, %20, %cst_27 {dimension_numbers = #tpu.dot_dimension_numbers<[1], [0], [0], [1], [0, 0, 1, 1], [], []>} : vector<2x16xf32>, vector<16x64xf32>, vector<2x64xf32> -> vector<2x64xf32>
    %30 = arith.addf %28, %29 : vector<2x64xf32>
    %31 = arith.negf %30 : vector<2x64xf32>
    %32 = math.exp %31 : vector<2x64xf32>
    %cst_28 = arith.constant 1.000000e+00 : f32
    %33 = vector.broadcast %cst_28 : f32 to vector<2x64xf32>
    %34 = arith.addf %33, %32 : vector<2x64xf32>
    %35 = arith.divf %33, %34 : vector<2x64xf32>
    %36 = vector.extract_strided_slice %35 {offsets = [0, 0], sizes = [2, 16], strides = [1, 1]} : vector<2x64xf32> to vector<2x16xf32>
    %37 = vector.extract_strided_slice %35 {offsets = [0, 16], sizes = [2, 16], strides = [1, 1]} : vector<2x64xf32> to vector<2x16xf32>
    %38 = vector.extract_strided_slice %35 {offsets = [0, 32], sizes = [2, 16], strides = [1, 1]} : vector<2x64xf32> to vector<2x16xf32>
    %cst_29 = arith.constant 2.000000e+00 : f32
    %39 = vector.broadcast %cst_29 : f32 to vector<2x16xf32>
    %40 = arith.mulf %39, %38 : vector<2x16xf32>
    %cst_30 = arith.constant 1.000000e+00 : f32
    %41 = vector.broadcast %cst_30 : f32 to vector<2x16xf32>
    %42 = arith.subf %40, %41 : vector<2x16xf32>
    %43 = vector.extract_strided_slice %35 {offsets = [0, 48], sizes = [2, 16], strides = [1, 1]} : vector<2x64xf32> to vector<2x16xf32>
    %44 = arith.mulf %37, %27 : vector<2x16xf32>
    %45 = arith.mulf %36, %42 : vector<2x16xf32>
    %46 = arith.addf %44, %45 : vector<2x16xf32>
    %47 = math.tanh %46 : vector<2x16xf32>
    %48 = arith.mulf %43, %47 : vector<2x16xf32>
    %49 = vector.extract_strided_slice %25 {offsets = [2, 0], sizes = [2, 64], strides = [1, 1]} : vector<16x64xf32> to vector<2x64xf32>
    %cst_31 = arith.constant dense<0.000000e+00> : vector<2x64xf32>
    %50 = tpu.matmul %48, %20, %cst_31 {dimension_numbers = #tpu.dot_dimension_numbers<[1], [0], [0], [1], [0, 0, 1, 1], [], []>} : vector<2x16xf32>, vector<16x64xf32>, vector<2x64xf32> -> vector<2x64xf32>
    %51 = arith.addf %49, %50 : vector<2x64xf32>
    %52 = arith.negf %51 : vector<2x64xf32>
    %53 = math.exp %52 : vector<2x64xf32>
    %cst_32 = arith.constant 1.000000e+00 : f32
    %54 = vector.broadcast %cst_32 : f32 to vector<2x64xf32>
    %55 = arith.addf %54, %53 : vector<2x64xf32>
    %56 = arith.divf %54, %55 : vector<2x64xf32>
    %57 = vector.extract_strided_slice %56 {offsets = [0, 0], sizes = [2, 16], strides = [1, 1]} : vector<2x64xf32> to vector<2x16xf32>
    %58 = vector.extract_strided_slice %56 {offsets = [0, 16], sizes = [2, 16], strides = [1, 1]} : vector<2x64xf32> to vector<2x16xf32>
    %59 = vector.extract_strided_slice %56 {offsets = [0, 32], sizes = [2, 16], strides = [1, 1]} : vector<2x64xf32> to vector<2x16xf32>
    %cst_33 = arith.constant 2.000000e+00 : f32
    %60 = vector.broadcast %cst_33 : f32 to vector<2x16xf32>
    %61 = arith.mulf %60, %59 : vector<2x16xf32>
    %cst_34 = arith.constant 1.000000e+00 : f32
    %62 = vector.broadcast %cst_34 : f32 to vector<2x16xf32>
    %63 = arith.subf %61, %62 : vector<2x16xf32>
    %64 = vector.extract_strided_slice %56 {offsets = [0, 48], sizes = [2, 16], strides = [1, 1]} : vector<2x64xf32> to vector<2x16xf32>
    %65 = arith.mulf %58, %46 : vector<2x16xf32>
    %66 = arith.mulf %57, %63 : vector<2x16xf32>
    %67 = arith.addf %65, %66 : vector<2x16xf32>
    %68 = math.tanh %67 : vector<2x16xf32>
    %69 = arith.mulf %64, %68 : vector<2x16xf32>
    %70 = vector.extract_strided_slice %25 {offsets = [4, 0], sizes = [2, 64], strides = [1, 1]} : vector<16x64xf32> to vector<2x64xf32>
    %cst_35 = arith.constant dense<0.000000e+00> : vector<2x64xf32>
    %71 = tpu.matmul %69, %20, %cst_35 {dimension_numbers = #tpu.dot_dimension_numbers<[1], [0], [0], [1], [0, 0, 1, 1], [], []>} : vector<2x16xf32>, vector<16x64xf32>, vector<2x64xf32> -> vector<2x64xf32>
    %72 = arith.addf %70, %71 : vector<2x64xf32>
    %73 = arith.negf %72 : vector<2x64xf32>
    %74 = math.exp %73 : vector<2x64xf32>
    %cst_36 = arith.constant 1.000000e+00 : f32
    %75 = vector.broadcast %cst_36 : f32 to vector<2x64xf32>
    %76 = arith.addf %75, %74 : vector<2x64xf32>
    %77 = arith.divf %75, %76 : vector<2x64xf32>
    %78 = vector.extract_strided_slice %77 {offsets = [0, 0], sizes = [2, 16], strides = [1, 1]} : vector<2x64xf32> to vector<2x16xf32>
    %79 = vector.extract_strided_slice %77 {offsets = [0, 16], sizes = [2, 16], strides = [1, 1]} : vector<2x64xf32> to vector<2x16xf32>
    %80 = vector.extract_strided_slice %77 {offsets = [0, 32], sizes = [2, 16], strides = [1, 1]} : vector<2x64xf32> to vector<2x16xf32>
    %cst_37 = arith.constant 2.000000e+00 : f32
    %81 = vector.broadcast %cst_37 : f32 to vector<2x16xf32>
    %82 = arith.mulf %81, %80 : vector<2x16xf32>
    %cst_38 = arith.constant 1.000000e+00 : f32
    %83 = vector.broadcast %cst_38 : f32 to vector<2x16xf32>
    %84 = arith.subf %82, %83 : vector<2x16xf32>
    %85 = vector.extract_strided_slice %77 {offsets = [0, 48], sizes = [2, 16], strides = [1, 1]} : vector<2x64xf32> to vector<2x16xf32>
    %86 = arith.mulf %79, %67 : vector<2x16xf32>
    %87 = arith.mulf %78, %84 : vector<2x16xf32>
    %88 = arith.addf %86, %87 : vector<2x16xf32>
    %89 = math.tanh %88 : vector<2x16xf32>
    %90 = arith.mulf %85, %89 : vector<2x16xf32>
    %91 = vector.extract_strided_slice %25 {offsets = [6, 0], sizes = [2, 64], strides = [1, 1]} : vector<16x64xf32> to vector<2x64xf32>
    %cst_39 = arith.constant dense<0.000000e+00> : vector<2x64xf32>
    %92 = tpu.matmul %90, %20, %cst_39 {dimension_numbers = #tpu.dot_dimension_numbers<[1], [0], [0], [1], [0, 0, 1, 1], [], []>} : vector<2x16xf32>, vector<16x64xf32>, vector<2x64xf32> -> vector<2x64xf32>
    %93 = arith.addf %91, %92 : vector<2x64xf32>
    %94 = arith.negf %93 : vector<2x64xf32>
    %95 = math.exp %94 : vector<2x64xf32>
    %cst_40 = arith.constant 1.000000e+00 : f32
    %96 = vector.broadcast %cst_40 : f32 to vector<2x64xf32>
    %97 = arith.addf %96, %95 : vector<2x64xf32>
    %98 = arith.divf %96, %97 : vector<2x64xf32>
    %99 = vector.extract_strided_slice %98 {offsets = [0, 0], sizes = [2, 16], strides = [1, 1]} : vector<2x64xf32> to vector<2x16xf32>
    %100 = vector.extract_strided_slice %98 {offsets = [0, 16], sizes = [2, 16], strides = [1, 1]} : vector<2x64xf32> to vector<2x16xf32>
    %101 = vector.extract_strided_slice %98 {offsets = [0, 32], sizes = [2, 16], strides = [1, 1]} : vector<2x64xf32> to vector<2x16xf32>
    %cst_41 = arith.constant 2.000000e+00 : f32
    %102 = vector.broadcast %cst_41 : f32 to vector<2x16xf32>
    %103 = arith.mulf %102, %101 : vector<2x16xf32>
    %cst_42 = arith.constant 1.000000e+00 : f32
    %104 = vector.broadcast %cst_42 : f32 to vector<2x16xf32>
    %105 = arith.subf %103, %104 : vector<2x16xf32>
    %106 = vector.extract_strided_slice %98 {offsets = [0, 48], sizes = [2, 16], strides = [1, 1]} : vector<2x64xf32> to vector<2x16xf32>
    %107 = arith.mulf %100, %88 : vector<2x16xf32>
    %108 = arith.mulf %99, %105 : vector<2x16xf32>
    %109 = arith.addf %107, %108 : vector<2x16xf32>
    %110 = math.tanh %109 : vector<2x16xf32>
    %111 = arith.mulf %106, %110 : vector<2x16xf32>
    %112 = vector.extract_strided_slice %25 {offsets = [8, 0], sizes = [2, 64], strides = [1, 1]} : vector<16x64xf32> to vector<2x64xf32>
    %cst_43 = arith.constant dense<0.000000e+00> : vector<2x64xf32>
    %113 = tpu.matmul %111, %20, %cst_43 {dimension_numbers = #tpu.dot_dimension_numbers<[1], [0], [0], [1], [0, 0, 1, 1], [], []>} : vector<2x16xf32>, vector<16x64xf32>, vector<2x64xf32> -> vector<2x64xf32>
    %114 = arith.addf %112, %113 : vector<2x64xf32>
    %115 = arith.negf %114 : vector<2x64xf32>
    %116 = math.exp %115 : vector<2x64xf32>
    %cst_44 = arith.constant 1.000000e+00 : f32
    %117 = vector.broadcast %cst_44 : f32 to vector<2x64xf32>
    %118 = arith.addf %117, %116 : vector<2x64xf32>
    %119 = arith.divf %117, %118 : vector<2x64xf32>
    %120 = vector.extract_strided_slice %119 {offsets = [0, 0], sizes = [2, 16], strides = [1, 1]} : vector<2x64xf32> to vector<2x16xf32>
    %121 = vector.extract_strided_slice %119 {offsets = [0, 16], sizes = [2, 16], strides = [1, 1]} : vector<2x64xf32> to vector<2x16xf32>
    %122 = vector.extract_strided_slice %119 {offsets = [0, 32], sizes = [2, 16], strides = [1, 1]} : vector<2x64xf32> to vector<2x16xf32>
    %cst_45 = arith.constant 2.000000e+00 : f32
    %123 = vector.broadcast %cst_45 : f32 to vector<2x16xf32>
    %124 = arith.mulf %123, %122 : vector<2x16xf32>
    %cst_46 = arith.constant 1.000000e+00 : f32
    %125 = vector.broadcast %cst_46 : f32 to vector<2x16xf32>
    %126 = arith.subf %124, %125 : vector<2x16xf32>
    %127 = vector.extract_strided_slice %119 {offsets = [0, 48], sizes = [2, 16], strides = [1, 1]} : vector<2x64xf32> to vector<2x16xf32>
    %128 = arith.mulf %121, %109 : vector<2x16xf32>
    %129 = arith.mulf %120, %126 : vector<2x16xf32>
    %130 = arith.addf %128, %129 : vector<2x16xf32>
    %131 = math.tanh %130 : vector<2x16xf32>
    %132 = arith.mulf %127, %131 : vector<2x16xf32>
    %133 = vector.extract_strided_slice %25 {offsets = [10, 0], sizes = [2, 64], strides = [1, 1]} : vector<16x64xf32> to vector<2x64xf32>
    %cst_47 = arith.constant dense<0.000000e+00> : vector<2x64xf32>
    %134 = tpu.matmul %132, %20, %cst_47 {dimension_numbers = #tpu.dot_dimension_numbers<[1], [0], [0], [1], [0, 0, 1, 1], [], []>} : vector<2x16xf32>, vector<16x64xf32>, vector<2x64xf32> -> vector<2x64xf32>
    %135 = arith.addf %133, %134 : vector<2x64xf32>
    %136 = arith.negf %135 : vector<2x64xf32>
    %137 = math.exp %136 : vector<2x64xf32>
    %cst_48 = arith.constant 1.000000e+00 : f32
    %138 = vector.broadcast %cst_48 : f32 to vector<2x64xf32>
    %139 = arith.addf %138, %137 : vector<2x64xf32>
    %140 = arith.divf %138, %139 : vector<2x64xf32>
    %141 = vector.extract_strided_slice %140 {offsets = [0, 0], sizes = [2, 16], strides = [1, 1]} : vector<2x64xf32> to vector<2x16xf32>
    %142 = vector.extract_strided_slice %140 {offsets = [0, 16], sizes = [2, 16], strides = [1, 1]} : vector<2x64xf32> to vector<2x16xf32>
    %143 = vector.extract_strided_slice %140 {offsets = [0, 32], sizes = [2, 16], strides = [1, 1]} : vector<2x64xf32> to vector<2x16xf32>
    %cst_49 = arith.constant 2.000000e+00 : f32
    %144 = vector.broadcast %cst_49 : f32 to vector<2x16xf32>
    %145 = arith.mulf %144, %143 : vector<2x16xf32>
    %cst_50 = arith.constant 1.000000e+00 : f32
    %146 = vector.broadcast %cst_50 : f32 to vector<2x16xf32>
    %147 = arith.subf %145, %146 : vector<2x16xf32>
    %148 = vector.extract_strided_slice %140 {offsets = [0, 48], sizes = [2, 16], strides = [1, 1]} : vector<2x64xf32> to vector<2x16xf32>
    %149 = arith.mulf %142, %130 : vector<2x16xf32>
    %150 = arith.mulf %141, %147 : vector<2x16xf32>
    %151 = arith.addf %149, %150 : vector<2x16xf32>
    %152 = math.tanh %151 : vector<2x16xf32>
    %153 = arith.mulf %148, %152 : vector<2x16xf32>
    %154 = vector.extract_strided_slice %25 {offsets = [12, 0], sizes = [2, 64], strides = [1, 1]} : vector<16x64xf32> to vector<2x64xf32>
    %cst_51 = arith.constant dense<0.000000e+00> : vector<2x64xf32>
    %155 = tpu.matmul %153, %20, %cst_51 {dimension_numbers = #tpu.dot_dimension_numbers<[1], [0], [0], [1], [0, 0, 1, 1], [], []>} : vector<2x16xf32>, vector<16x64xf32>, vector<2x64xf32> -> vector<2x64xf32>
    %156 = arith.addf %154, %155 : vector<2x64xf32>
    %157 = arith.negf %156 : vector<2x64xf32>
    %158 = math.exp %157 : vector<2x64xf32>
    %cst_52 = arith.constant 1.000000e+00 : f32
    %159 = vector.broadcast %cst_52 : f32 to vector<2x64xf32>
    %160 = arith.addf %159, %158 : vector<2x64xf32>
    %161 = arith.divf %159, %160 : vector<2x64xf32>
    %162 = vector.extract_strided_slice %161 {offsets = [0, 0], sizes = [2, 16], strides = [1, 1]} : vector<2x64xf32> to vector<2x16xf32>
    %163 = vector.extract_strided_slice %161 {offsets = [0, 16], sizes = [2, 16], strides = [1, 1]} : vector<2x64xf32> to vector<2x16xf32>
    %164 = vector.extract_strided_slice %161 {offsets = [0, 32], sizes = [2, 16], strides = [1, 1]} : vector<2x64xf32> to vector<2x16xf32>
    %cst_53 = arith.constant 2.000000e+00 : f32
    %165 = vector.broadcast %cst_53 : f32 to vector<2x16xf32>
    %166 = arith.mulf %165, %164 : vector<2x16xf32>
    %cst_54 = arith.constant 1.000000e+00 : f32
    %167 = vector.broadcast %cst_54 : f32 to vector<2x16xf32>
    %168 = arith.subf %166, %167 : vector<2x16xf32>
    %169 = vector.extract_strided_slice %161 {offsets = [0, 48], sizes = [2, 16], strides = [1, 1]} : vector<2x64xf32> to vector<2x16xf32>
    %170 = arith.mulf %163, %151 : vector<2x16xf32>
    %171 = arith.mulf %162, %168 : vector<2x16xf32>
    %172 = arith.addf %170, %171 : vector<2x16xf32>
    %173 = math.tanh %172 : vector<2x16xf32>
    %174 = arith.mulf %169, %173 : vector<2x16xf32>
    %175 = vector.extract_strided_slice %25 {offsets = [14, 0], sizes = [2, 64], strides = [1, 1]} : vector<16x64xf32> to vector<2x64xf32>
    %cst_55 = arith.constant dense<0.000000e+00> : vector<2x64xf32>
    %176 = tpu.matmul %174, %20, %cst_55 {dimension_numbers = #tpu.dot_dimension_numbers<[1], [0], [0], [1], [0, 0, 1, 1], [], []>} : vector<2x16xf32>, vector<16x64xf32>, vector<2x64xf32> -> vector<2x64xf32>
    %177 = arith.addf %175, %176 : vector<2x64xf32>
    %178 = arith.negf %177 : vector<2x64xf32>
    %179 = math.exp %178 : vector<2x64xf32>
    %cst_56 = arith.constant 1.000000e+00 : f32
    %180 = vector.broadcast %cst_56 : f32 to vector<2x64xf32>
    %181 = arith.addf %180, %179 : vector<2x64xf32>
    %182 = arith.divf %180, %181 : vector<2x64xf32>
    %183 = vector.extract_strided_slice %182 {offsets = [0, 0], sizes = [2, 16], strides = [1, 1]} : vector<2x64xf32> to vector<2x16xf32>
    %184 = vector.extract_strided_slice %182 {offsets = [0, 16], sizes = [2, 16], strides = [1, 1]} : vector<2x64xf32> to vector<2x16xf32>
    %185 = vector.extract_strided_slice %182 {offsets = [0, 32], sizes = [2, 16], strides = [1, 1]} : vector<2x64xf32> to vector<2x16xf32>
    %cst_57 = arith.constant 2.000000e+00 : f32
    %186 = vector.broadcast %cst_57 : f32 to vector<2x16xf32>
    %187 = arith.mulf %186, %185 : vector<2x16xf32>
    %cst_58 = arith.constant 1.000000e+00 : f32
    %188 = vector.broadcast %cst_58 : f32 to vector<2x16xf32>
    %189 = arith.subf %187, %188 : vector<2x16xf32>
    %190 = vector.extract_strided_slice %182 {offsets = [0, 48], sizes = [2, 16], strides = [1, 1]} : vector<2x64xf32> to vector<2x16xf32>
    %191 = arith.mulf %184, %172 : vector<2x16xf32>
    %192 = arith.mulf %183, %189 : vector<2x16xf32>
    %193 = arith.addf %191, %192 : vector<2x16xf32>
    %194 = math.tanh %193 : vector<2x16xf32>
    %195 = arith.mulf %190, %194 : vector<2x16xf32>
    %196 = tpu.concatenate %48, %69, %90, %111, %132, %153, %174, %195 in 0 : vector<2x16xf32>, vector<2x16xf32>, vector<2x16xf32>, vector<2x16xf32>, vector<2x16xf32>, vector<2x16xf32>, vector<2x16xf32>, vector<2x16xf32> -> vector<16x16xf32>
    %c1_59 = arith.constant 1 : index
    %c0_60 = arith.constant 0 : index
    %c0_61 = arith.constant 0 : index
    %197 = vector.load %arg1[%c1_59, %c0_60, %c0_61] : memref<2x16x64xf32, #tpu.memory_space<vmem>>, vector<1x16x64xf32>
    %198 = vector.shape_cast %197 : vector<1x16x64xf32> to vector<16x64xf32>
    %c1_62 = arith.constant 1 : index
    %c0_63 = arith.constant 0 : index
    %c0_64 = arith.constant 0 : index
    %199 = vector.load %arg2[%c1_62, %c0_63, %c0_64] : memref<2x16x64xf32, #tpu.memory_space<vmem>>, vector<1x16x64xf32>
    %200 = vector.shape_cast %199 : vector<1x16x64xf32> to vector<16x64xf32>
    %c1_65 = arith.constant 1 : index
    %c0_66 = arith.constant 0 : index
    %c0_67 = arith.constant 0 : index
    %201 = vector.load %arg3[%c1_65, %c0_66, %c0_67] : memref<2x1x64xf32, #tpu.memory_space<vmem>>, vector<1x1x64xf32>
    %202 = vector.shape_cast %201 : vector<1x1x64xf32> to vector<1x64xf32>
    %cst_68 = arith.constant dense<0.000000e+00> : vector<16x64xf32>
    %203 = tpu.matmul %196, %198, %cst_68 {dimension_numbers = #tpu.dot_dimension_numbers<[1], [0], [0], [1], [0, 0, 1, 1], [], []>} : vector<16x16xf32>, vector<16x64xf32>, vector<16x64xf32> -> vector<16x64xf32>
    %204 = vector.broadcast %202 : vector<1x64xf32> to vector<16x64xf32>
    %205 = arith.addf %203, %204 : vector<16x64xf32>
    %cst_69 = arith.constant 0.000000e+00 : f32
    %206 = vector.broadcast %cst_69 : f32 to vector<2x16xf32>
    %cst_70 = arith.constant 0.000000e+00 : f32
    %207 = vector.broadcast %cst_70 : f32 to vector<2x16xf32>
    %208 = vector.extract_strided_slice %205 {offsets = [0, 0], sizes = [2, 64], strides = [1, 1]} : vector<16x64xf32> to vector<2x64xf32>
    %cst_71 = arith.constant dense<0.000000e+00> : vector<2x64xf32>
    %209 = tpu.matmul %206, %200, %cst_71 {dimension_numbers = #tpu.dot_dimension_numbers<[1], [0], [0], [1], [0, 0, 1, 1], [], []>} : vector<2x16xf32>, vector<16x64xf32>, vector<2x64xf32> -> vector<2x64xf32>
    %210 = arith.addf %208, %209 : vector<2x64xf32>
    %211 = arith.negf %210 : vector<2x64xf32>
    %212 = math.exp %211 : vector<2x64xf32>
    %cst_72 = arith.constant 1.000000e+00 : f32
    %213 = vector.broadcast %cst_72 : f32 to vector<2x64xf32>
    %214 = arith.addf %213, %212 : vector<2x64xf32>
    %215 = arith.divf %213, %214 : vector<2x64xf32>
    %216 = vector.extract_strided_slice %215 {offsets = [0, 0], sizes = [2, 16], strides = [1, 1]} : vector<2x64xf32> to vector<2x16xf32>
    %217 = vector.extract_strided_slice %215 {offsets = [0, 16], sizes = [2, 16], strides = [1, 1]} : vector<2x64xf32> to vector<2x16xf32>
    %218 = vector.extract_strided_slice %215 {offsets = [0, 32], sizes = [2, 16], strides = [1, 1]} : vector<2x64xf32> to vector<2x16xf32>
    %cst_73 = arith.constant 2.000000e+00 : f32
    %219 = vector.broadcast %cst_73 : f32 to vector<2x16xf32>
    %220 = arith.mulf %219, %218 : vector<2x16xf32>
    %cst_74 = arith.constant 1.000000e+00 : f32
    %221 = vector.broadcast %cst_74 : f32 to vector<2x16xf32>
    %222 = arith.subf %220, %221 : vector<2x16xf32>
    %223 = vector.extract_strided_slice %215 {offsets = [0, 48], sizes = [2, 16], strides = [1, 1]} : vector<2x64xf32> to vector<2x16xf32>
    %224 = arith.mulf %217, %207 : vector<2x16xf32>
    %225 = arith.mulf %216, %222 : vector<2x16xf32>
    %226 = arith.addf %224, %225 : vector<2x16xf32>
    %227 = math.tanh %226 : vector<2x16xf32>
    %228 = arith.mulf %223, %227 : vector<2x16xf32>
    %229 = vector.extract_strided_slice %205 {offsets = [2, 0], sizes = [2, 64], strides = [1, 1]} : vector<16x64xf32> to vector<2x64xf32>
    %cst_75 = arith.constant dense<0.000000e+00> : vector<2x64xf32>
    %230 = tpu.matmul %228, %200, %cst_75 {dimension_numbers = #tpu.dot_dimension_numbers<[1], [0], [0], [1], [0, 0, 1, 1], [], []>} : vector<2x16xf32>, vector<16x64xf32>, vector<2x64xf32> -> vector<2x64xf32>
    %231 = arith.addf %229, %230 : vector<2x64xf32>
    %232 = arith.negf %231 : vector<2x64xf32>
    %233 = math.exp %232 : vector<2x64xf32>
    %cst_76 = arith.constant 1.000000e+00 : f32
    %234 = vector.broadcast %cst_76 : f32 to vector<2x64xf32>
    %235 = arith.addf %234, %233 : vector<2x64xf32>
    %236 = arith.divf %234, %235 : vector<2x64xf32>
    %237 = vector.extract_strided_slice %236 {offsets = [0, 0], sizes = [2, 16], strides = [1, 1]} : vector<2x64xf32> to vector<2x16xf32>
    %238 = vector.extract_strided_slice %236 {offsets = [0, 16], sizes = [2, 16], strides = [1, 1]} : vector<2x64xf32> to vector<2x16xf32>
    %239 = vector.extract_strided_slice %236 {offsets = [0, 32], sizes = [2, 16], strides = [1, 1]} : vector<2x64xf32> to vector<2x16xf32>
    %cst_77 = arith.constant 2.000000e+00 : f32
    %240 = vector.broadcast %cst_77 : f32 to vector<2x16xf32>
    %241 = arith.mulf %240, %239 : vector<2x16xf32>
    %cst_78 = arith.constant 1.000000e+00 : f32
    %242 = vector.broadcast %cst_78 : f32 to vector<2x16xf32>
    %243 = arith.subf %241, %242 : vector<2x16xf32>
    %244 = vector.extract_strided_slice %236 {offsets = [0, 48], sizes = [2, 16], strides = [1, 1]} : vector<2x64xf32> to vector<2x16xf32>
    %245 = arith.mulf %238, %226 : vector<2x16xf32>
    %246 = arith.mulf %237, %243 : vector<2x16xf32>
    %247 = arith.addf %245, %246 : vector<2x16xf32>
    %248 = math.tanh %247 : vector<2x16xf32>
    %249 = arith.mulf %244, %248 : vector<2x16xf32>
    %250 = vector.extract_strided_slice %205 {offsets = [4, 0], sizes = [2, 64], strides = [1, 1]} : vector<16x64xf32> to vector<2x64xf32>
    %cst_79 = arith.constant dense<0.000000e+00> : vector<2x64xf32>
    %251 = tpu.matmul %249, %200, %cst_79 {dimension_numbers = #tpu.dot_dimension_numbers<[1], [0], [0], [1], [0, 0, 1, 1], [], []>} : vector<2x16xf32>, vector<16x64xf32>, vector<2x64xf32> -> vector<2x64xf32>
    %252 = arith.addf %250, %251 : vector<2x64xf32>
    %253 = arith.negf %252 : vector<2x64xf32>
    %254 = math.exp %253 : vector<2x64xf32>
    %cst_80 = arith.constant 1.000000e+00 : f32
    %255 = vector.broadcast %cst_80 : f32 to vector<2x64xf32>
    %256 = arith.addf %255, %254 : vector<2x64xf32>
    %257 = arith.divf %255, %256 : vector<2x64xf32>
    %258 = vector.extract_strided_slice %257 {offsets = [0, 0], sizes = [2, 16], strides = [1, 1]} : vector<2x64xf32> to vector<2x16xf32>
    %259 = vector.extract_strided_slice %257 {offsets = [0, 16], sizes = [2, 16], strides = [1, 1]} : vector<2x64xf32> to vector<2x16xf32>
    %260 = vector.extract_strided_slice %257 {offsets = [0, 32], sizes = [2, 16], strides = [1, 1]} : vector<2x64xf32> to vector<2x16xf32>
    %cst_81 = arith.constant 2.000000e+00 : f32
    %261 = vector.broadcast %cst_81 : f32 to vector<2x16xf32>
    %262 = arith.mulf %261, %260 : vector<2x16xf32>
    %cst_82 = arith.constant 1.000000e+00 : f32
    %263 = vector.broadcast %cst_82 : f32 to vector<2x16xf32>
    %264 = arith.subf %262, %263 : vector<2x16xf32>
    %265 = vector.extract_strided_slice %257 {offsets = [0, 48], sizes = [2, 16], strides = [1, 1]} : vector<2x64xf32> to vector<2x16xf32>
    %266 = arith.mulf %259, %247 : vector<2x16xf32>
    %267 = arith.mulf %258, %264 : vector<2x16xf32>
    %268 = arith.addf %266, %267 : vector<2x16xf32>
    %269 = math.tanh %268 : vector<2x16xf32>
    %270 = arith.mulf %265, %269 : vector<2x16xf32>
    %271 = vector.extract_strided_slice %205 {offsets = [6, 0], sizes = [2, 64], strides = [1, 1]} : vector<16x64xf32> to vector<2x64xf32>
    %cst_83 = arith.constant dense<0.000000e+00> : vector<2x64xf32>
    %272 = tpu.matmul %270, %200, %cst_83 {dimension_numbers = #tpu.dot_dimension_numbers<[1], [0], [0], [1], [0, 0, 1, 1], [], []>} : vector<2x16xf32>, vector<16x64xf32>, vector<2x64xf32> -> vector<2x64xf32>
    %273 = arith.addf %271, %272 : vector<2x64xf32>
    %274 = arith.negf %273 : vector<2x64xf32>
    %275 = math.exp %274 : vector<2x64xf32>
    %cst_84 = arith.constant 1.000000e+00 : f32
    %276 = vector.broadcast %cst_84 : f32 to vector<2x64xf32>
    %277 = arith.addf %276, %275 : vector<2x64xf32>
    %278 = arith.divf %276, %277 : vector<2x64xf32>
    %279 = vector.extract_strided_slice %278 {offsets = [0, 0], sizes = [2, 16], strides = [1, 1]} : vector<2x64xf32> to vector<2x16xf32>
    %280 = vector.extract_strided_slice %278 {offsets = [0, 16], sizes = [2, 16], strides = [1, 1]} : vector<2x64xf32> to vector<2x16xf32>
    %281 = vector.extract_strided_slice %278 {offsets = [0, 32], sizes = [2, 16], strides = [1, 1]} : vector<2x64xf32> to vector<2x16xf32>
    %cst_85 = arith.constant 2.000000e+00 : f32
    %282 = vector.broadcast %cst_85 : f32 to vector<2x16xf32>
    %283 = arith.mulf %282, %281 : vector<2x16xf32>
    %cst_86 = arith.constant 1.000000e+00 : f32
    %284 = vector.broadcast %cst_86 : f32 to vector<2x16xf32>
    %285 = arith.subf %283, %284 : vector<2x16xf32>
    %286 = vector.extract_strided_slice %278 {offsets = [0, 48], sizes = [2, 16], strides = [1, 1]} : vector<2x64xf32> to vector<2x16xf32>
    %287 = arith.mulf %280, %268 : vector<2x16xf32>
    %288 = arith.mulf %279, %285 : vector<2x16xf32>
    %289 = arith.addf %287, %288 : vector<2x16xf32>
    %290 = math.tanh %289 : vector<2x16xf32>
    %291 = arith.mulf %286, %290 : vector<2x16xf32>
    %292 = vector.extract_strided_slice %205 {offsets = [8, 0], sizes = [2, 64], strides = [1, 1]} : vector<16x64xf32> to vector<2x64xf32>
    %cst_87 = arith.constant dense<0.000000e+00> : vector<2x64xf32>
    %293 = tpu.matmul %291, %200, %cst_87 {dimension_numbers = #tpu.dot_dimension_numbers<[1], [0], [0], [1], [0, 0, 1, 1], [], []>} : vector<2x16xf32>, vector<16x64xf32>, vector<2x64xf32> -> vector<2x64xf32>
    %294 = arith.addf %292, %293 : vector<2x64xf32>
    %295 = arith.negf %294 : vector<2x64xf32>
    %296 = math.exp %295 : vector<2x64xf32>
    %cst_88 = arith.constant 1.000000e+00 : f32
    %297 = vector.broadcast %cst_88 : f32 to vector<2x64xf32>
    %298 = arith.addf %297, %296 : vector<2x64xf32>
    %299 = arith.divf %297, %298 : vector<2x64xf32>
    %300 = vector.extract_strided_slice %299 {offsets = [0, 0], sizes = [2, 16], strides = [1, 1]} : vector<2x64xf32> to vector<2x16xf32>
    %301 = vector.extract_strided_slice %299 {offsets = [0, 16], sizes = [2, 16], strides = [1, 1]} : vector<2x64xf32> to vector<2x16xf32>
    %302 = vector.extract_strided_slice %299 {offsets = [0, 32], sizes = [2, 16], strides = [1, 1]} : vector<2x64xf32> to vector<2x16xf32>
    %cst_89 = arith.constant 2.000000e+00 : f32
    %303 = vector.broadcast %cst_89 : f32 to vector<2x16xf32>
    %304 = arith.mulf %303, %302 : vector<2x16xf32>
    %cst_90 = arith.constant 1.000000e+00 : f32
    %305 = vector.broadcast %cst_90 : f32 to vector<2x16xf32>
    %306 = arith.subf %304, %305 : vector<2x16xf32>
    %307 = vector.extract_strided_slice %299 {offsets = [0, 48], sizes = [2, 16], strides = [1, 1]} : vector<2x64xf32> to vector<2x16xf32>
    %308 = arith.mulf %301, %289 : vector<2x16xf32>
    %309 = arith.mulf %300, %306 : vector<2x16xf32>
    %310 = arith.addf %308, %309 : vector<2x16xf32>
    %311 = math.tanh %310 : vector<2x16xf32>
    %312 = arith.mulf %307, %311 : vector<2x16xf32>
    %313 = vector.extract_strided_slice %205 {offsets = [10, 0], sizes = [2, 64], strides = [1, 1]} : vector<16x64xf32> to vector<2x64xf32>
    %cst_91 = arith.constant dense<0.000000e+00> : vector<2x64xf32>
    %314 = tpu.matmul %312, %200, %cst_91 {dimension_numbers = #tpu.dot_dimension_numbers<[1], [0], [0], [1], [0, 0, 1, 1], [], []>} : vector<2x16xf32>, vector<16x64xf32>, vector<2x64xf32> -> vector<2x64xf32>
    %315 = arith.addf %313, %314 : vector<2x64xf32>
    %316 = arith.negf %315 : vector<2x64xf32>
    %317 = math.exp %316 : vector<2x64xf32>
    %cst_92 = arith.constant 1.000000e+00 : f32
    %318 = vector.broadcast %cst_92 : f32 to vector<2x64xf32>
    %319 = arith.addf %318, %317 : vector<2x64xf32>
    %320 = arith.divf %318, %319 : vector<2x64xf32>
    %321 = vector.extract_strided_slice %320 {offsets = [0, 0], sizes = [2, 16], strides = [1, 1]} : vector<2x64xf32> to vector<2x16xf32>
    %322 = vector.extract_strided_slice %320 {offsets = [0, 16], sizes = [2, 16], strides = [1, 1]} : vector<2x64xf32> to vector<2x16xf32>
    %323 = vector.extract_strided_slice %320 {offsets = [0, 32], sizes = [2, 16], strides = [1, 1]} : vector<2x64xf32> to vector<2x16xf32>
    %cst_93 = arith.constant 2.000000e+00 : f32
    %324 = vector.broadcast %cst_93 : f32 to vector<2x16xf32>
    %325 = arith.mulf %324, %323 : vector<2x16xf32>
    %cst_94 = arith.constant 1.000000e+00 : f32
    %326 = vector.broadcast %cst_94 : f32 to vector<2x16xf32>
    %327 = arith.subf %325, %326 : vector<2x16xf32>
    %328 = vector.extract_strided_slice %320 {offsets = [0, 48], sizes = [2, 16], strides = [1, 1]} : vector<2x64xf32> to vector<2x16xf32>
    %329 = arith.mulf %322, %310 : vector<2x16xf32>
    %330 = arith.mulf %321, %327 : vector<2x16xf32>
    %331 = arith.addf %329, %330 : vector<2x16xf32>
    %332 = math.tanh %331 : vector<2x16xf32>
    %333 = arith.mulf %328, %332 : vector<2x16xf32>
    %334 = vector.extract_strided_slice %205 {offsets = [12, 0], sizes = [2, 64], strides = [1, 1]} : vector<16x64xf32> to vector<2x64xf32>
    %cst_95 = arith.constant dense<0.000000e+00> : vector<2x64xf32>
    %335 = tpu.matmul %333, %200, %cst_95 {dimension_numbers = #tpu.dot_dimension_numbers<[1], [0], [0], [1], [0, 0, 1, 1], [], []>} : vector<2x16xf32>, vector<16x64xf32>, vector<2x64xf32> -> vector<2x64xf32>
    %336 = arith.addf %334, %335 : vector<2x64xf32>
    %337 = arith.negf %336 : vector<2x64xf32>
    %338 = math.exp %337 : vector<2x64xf32>
    %cst_96 = arith.constant 1.000000e+00 : f32
    %339 = vector.broadcast %cst_96 : f32 to vector<2x64xf32>
    %340 = arith.addf %339, %338 : vector<2x64xf32>
    %341 = arith.divf %339, %340 : vector<2x64xf32>
    %342 = vector.extract_strided_slice %341 {offsets = [0, 0], sizes = [2, 16], strides = [1, 1]} : vector<2x64xf32> to vector<2x16xf32>
    %343 = vector.extract_strided_slice %341 {offsets = [0, 16], sizes = [2, 16], strides = [1, 1]} : vector<2x64xf32> to vector<2x16xf32>
    %344 = vector.extract_strided_slice %341 {offsets = [0, 32], sizes = [2, 16], strides = [1, 1]} : vector<2x64xf32> to vector<2x16xf32>
    %cst_97 = arith.constant 2.000000e+00 : f32
    %345 = vector.broadcast %cst_97 : f32 to vector<2x16xf32>
    %346 = arith.mulf %345, %344 : vector<2x16xf32>
    %cst_98 = arith.constant 1.000000e+00 : f32
    %347 = vector.broadcast %cst_98 : f32 to vector<2x16xf32>
    %348 = arith.subf %346, %347 : vector<2x16xf32>
    %349 = vector.extract_strided_slice %341 {offsets = [0, 48], sizes = [2, 16], strides = [1, 1]} : vector<2x64xf32> to vector<2x16xf32>
    %350 = arith.mulf %343, %331 : vector<2x16xf32>
    %351 = arith.mulf %342, %348 : vector<2x16xf32>
    %352 = arith.addf %350, %351 : vector<2x16xf32>
    %353 = math.tanh %352 : vector<2x16xf32>
    %354 = arith.mulf %349, %353 : vector<2x16xf32>
    %355 = vector.extract_strided_slice %205 {offsets = [14, 0], sizes = [2, 64], strides = [1, 1]} : vector<16x64xf32> to vector<2x64xf32>
    %cst_99 = arith.constant dense<0.000000e+00> : vector<2x64xf32>
    %356 = tpu.matmul %354, %200, %cst_99 {dimension_numbers = #tpu.dot_dimension_numbers<[1], [0], [0], [1], [0, 0, 1, 1], [], []>} : vector<2x16xf32>, vector<16x64xf32>, vector<2x64xf32> -> vector<2x64xf32>
    %357 = arith.addf %355, %356 : vector<2x64xf32>
    %358 = arith.negf %357 : vector<2x64xf32>
    %359 = math.exp %358 : vector<2x64xf32>
    %cst_100 = arith.constant 1.000000e+00 : f32
    %360 = vector.broadcast %cst_100 : f32 to vector<2x64xf32>
    %361 = arith.addf %360, %359 : vector<2x64xf32>
    %362 = arith.divf %360, %361 : vector<2x64xf32>
    %363 = vector.extract_strided_slice %362 {offsets = [0, 0], sizes = [2, 16], strides = [1, 1]} : vector<2x64xf32> to vector<2x16xf32>
    %364 = vector.extract_strided_slice %362 {offsets = [0, 16], sizes = [2, 16], strides = [1, 1]} : vector<2x64xf32> to vector<2x16xf32>
    %365 = vector.extract_strided_slice %362 {offsets = [0, 32], sizes = [2, 16], strides = [1, 1]} : vector<2x64xf32> to vector<2x16xf32>
    %cst_101 = arith.constant 2.000000e+00 : f32
    %366 = vector.broadcast %cst_101 : f32 to vector<2x16xf32>
    %367 = arith.mulf %366, %365 : vector<2x16xf32>
    %cst_102 = arith.constant 1.000000e+00 : f32
    %368 = vector.broadcast %cst_102 : f32 to vector<2x16xf32>
    %369 = arith.subf %367, %368 : vector<2x16xf32>
    %370 = vector.extract_strided_slice %362 {offsets = [0, 48], sizes = [2, 16], strides = [1, 1]} : vector<2x64xf32> to vector<2x16xf32>
    %371 = arith.mulf %364, %352 : vector<2x16xf32>
    %372 = arith.mulf %363, %369 : vector<2x16xf32>
    %373 = arith.addf %371, %372 : vector<2x16xf32>
    %374 = math.tanh %373 : vector<2x16xf32>
    %375 = arith.mulf %370, %374 : vector<2x16xf32>
    %376 = tpu.concatenate %228, %249, %270, %291, %312, %333, %354, %375 in 1 : vector<2x16xf32>, vector<2x16xf32>, vector<2x16xf32>, vector<2x16xf32>, vector<2x16xf32>, vector<2x16xf32>, vector<2x16xf32>, vector<2x16xf32> -> vector<2x128xf32>
    %c0_103 = arith.constant 0 : index
    %c0_104 = arith.constant 0 : index
    %377 = vector.load %arg4[%c0_103, %c0_104] : memref<128x32xf32, #tpu.memory_space<vmem>>, vector<128x32xf32>
    %cst_105 = arith.constant dense<0.000000e+00> : vector<2x32xf32>
    %378 = tpu.matmul %376, %377, %cst_105 {dimension_numbers = #tpu.dot_dimension_numbers<[1], [0], [0], [1], [0, 0, 1, 1], [], []>} : vector<2x128xf32>, vector<128x32xf32>, vector<2x32xf32> -> vector<2x32xf32>
    %c0_106 = arith.constant 0 : index
    %c0_107 = arith.constant 0 : index
    %379 = vector.load %arg5[%c0_106, %c0_107] : memref<1x32xf32, #tpu.memory_space<vmem>>, vector<1x32xf32>
    %380 = vector.broadcast %379 : vector<1x32xf32> to vector<2x32xf32>
    %381 = arith.addf %378, %380 : vector<2x32xf32>
    %cst_108 = arith.constant 0.000000e+00 : f32
    %382 = vector.broadcast %cst_108 : f32 to vector<2x32xf32>
    %383 = arith.maximumf %381, %382 : vector<2x32xf32>
    %c0_109 = arith.constant 0 : index
    %c0_110 = arith.constant 0 : index
    %384 = vector.load %arg6[%c0_109, %c0_110] : memref<32x16xf32, #tpu.memory_space<vmem>>, vector<32x16xf32>
    %cst_111 = arith.constant dense<0.000000e+00> : vector<2x16xf32>
    %385 = tpu.matmul %383, %384, %cst_111 {dimension_numbers = #tpu.dot_dimension_numbers<[1], [0], [0], [1], [0, 0, 1, 1], [], []>} : vector<2x32xf32>, vector<32x16xf32>, vector<2x16xf32> -> vector<2x16xf32>
    %c0_112 = arith.constant 0 : index
    %c0_113 = arith.constant 0 : index
    %386 = vector.load %arg7[%c0_112, %c0_113] : memref<1x16xf32, #tpu.memory_space<vmem>>, vector<1x16xf32>
    %387 = vector.broadcast %386 : vector<1x16xf32> to vector<2x16xf32>
    %388 = arith.addf %385, %387 : vector<2x16xf32>
    %cst_114 = arith.constant 0.000000e+00 : f32
    %389 = vector.broadcast %cst_114 : f32 to vector<2x16xf32>
    %390 = arith.maximumf %388, %389 : vector<2x16xf32>
    %c0_115 = arith.constant 0 : index
    %c0_116 = arith.constant 0 : index
    %391 = vector.load %arg8[%c0_115, %c0_116] : memref<16x8xf32, #tpu.memory_space<vmem>>, vector<16x8xf32>
    %cst_117 = arith.constant dense<0.000000e+00> : vector<2x8xf32>
    %392 = tpu.matmul %390, %391, %cst_117 {dimension_numbers = #tpu.dot_dimension_numbers<[1], [0], [0], [1], [0, 0, 1, 1], [], []>} : vector<2x16xf32>, vector<16x8xf32>, vector<2x8xf32> -> vector<2x8xf32>
    %c0_118 = arith.constant 0 : index
    %c0_119 = arith.constant 0 : index
    %393 = vector.load %arg9[%c0_118, %c0_119] : memref<1x8xf32, #tpu.memory_space<vmem>>, vector<1x8xf32>
    %394 = vector.broadcast %393 : vector<1x8xf32> to vector<2x8xf32>
    %395 = arith.addf %392, %394 : vector<2x8xf32>
    %cst_120 = arith.constant 0.000000e+00 : f32
    %396 = vector.broadcast %cst_120 : f32 to vector<2x8xf32>
    %397 = arith.maximumf %395, %396 : vector<2x8xf32>
    %c0_121 = arith.constant 0 : index
    %c0_122 = arith.constant 0 : index
    %398 = vector.load %arg10[%c0_121, %c0_122] : memref<8x4xf32, #tpu.memory_space<vmem>>, vector<8x4xf32>
    %cst_123 = arith.constant dense<0.000000e+00> : vector<2x4xf32>
    %399 = tpu.matmul %397, %398, %cst_123 {dimension_numbers = #tpu.dot_dimension_numbers<[1], [0], [0], [1], [0, 0, 1, 1], [], []>} : vector<2x8xf32>, vector<8x4xf32>, vector<2x4xf32> -> vector<2x4xf32>
    %c0_124 = arith.constant 0 : index
    %c0_125 = arith.constant 0 : index
    %400 = vector.load %arg11[%c0_124, %c0_125] : memref<1x4xf32, #tpu.memory_space<vmem>>, vector<1x4xf32>
    %401 = vector.broadcast %400 : vector<1x4xf32> to vector<2x4xf32>
    %402 = arith.addf %399, %401 : vector<2x4xf32>
    %403 = tpu.concatenate %402, %195, %193, %375, %373 in 1 : vector<2x4xf32>, vector<2x16xf32>, vector<2x16xf32>, vector<2x16xf32>, vector<2x16xf32> -> vector<2x68xf32>
    %c0_126 = arith.constant 0 : index
    %c0_127 = arith.constant 0 : index
    %404 = vector.load %arg12[%c0_126, %c0_127] : memref<2x68xf32, #tpu.memory_space<vmem>>, vector<2x68xf32>
    tpu.vector_store %arg12[%c0_126, %c0_127], %403 {strides = array<i32>} : memref<2x68xf32, #tpu.memory_space<vmem>>, vector<2x68xf32>,
    return
  }
}

</mosaic_0001>

<llo_original>
// kernel: lstm_direct_forward.1
$region0: #{lstm_direct_forward.1}
  #allocation0 [shape = 'u32[]', space=smem, size = 0x4, offset = 0x4, fixed_abs, tag = 'smem constant byte address 0x4 - core index']
  #allocation1 [shape = 'u32[144,128]{1,0:T(1,128)}', space=vmem, size = 0x12000, scoped, tag = 'internal scratch']
  %s0 = inlined_call_operand.vmem [shape: f32[2,8,16], index: 0, kind: input, shape index: {}]
  %s1 = inlined_call_operand.vmem [shape: f32[2,16,64], index: 1, kind: input, shape index: {}]
  %s2 = inlined_call_operand.vmem [shape: f32[2,16,64], index: 2, kind: input, shape index: {}]
  %s3 = inlined_call_operand.vmem [shape: f32[2,1,64], index: 3, kind: input, shape index: {}]
  %s4 = inlined_call_operand.vmem [shape: f32[128,32], index: 4, kind: input, shape index: {}]
  %s5 = inlined_call_operand.vmem [shape: f32[1,32], index: 5, kind: input, shape index: {}]
  %s6 = inlined_call_operand.vmem [shape: f32[32,16], index: 6, kind: input, shape index: {}]
  %s7 = inlined_call_operand.vmem [shape: f32[1,16], index: 7, kind: input, shape index: {}]
  %s8 = inlined_call_operand.vmem [shape: f32[16,8], index: 8, kind: input, shape index: {}]
  %s9 = inlined_call_operand.vmem [shape: f32[1,8], index: 9, kind: input, shape index: {}]
  %s10 = inlined_call_operand.vmem [shape: f32[8,4], index: 10, kind: input, shape index: {}]
  %s11 = inlined_call_operand.vmem [shape: f32[1,4], index: 11, kind: input, shape index: {}]
  %s12 = inlined_call_operand.vmem [shape: f32[2,68], index: 12, kind: output, shape index: {}]
  %s13 = sld [smem:[#allocation0]]
  $region58: #{lstm_direct_forward.1} parent=0
    _
  %s15 = ssub.s32 1, %s13
  %s16 = scalar_select 0, %s15, %s13
  // Predicated region
  $region2: #{lstm_direct_forward.1} parent=0 // pred_check
    _
  $region3: #{lstm_direct_forward.1} parent=0 // pred_check_branch
    %18 = sbr.rel (0) target = $region5
  $region4: #{lstm_direct_forward.1} parent=0 // pred_region
    _
  $region5: #{lstm_direct_forward.1} parent=0 // pred_fallthru
    _
  // Predicated region
  $region6: #{lstm_direct_forward.1} parent=0 // pred_check
    _
  $region7: #{lstm_direct_forward.1} parent=0 // pred_check_branch
    %20 = sbr.rel (0) target = $region9
  $region8: #{lstm_direct_forward.1} parent=0 // pred_region
    _
  $region9: #{lstm_direct_forward.1} parent=0 // pred_fallthru
    _
  // Predicated region
  $region10: #{lstm_direct_forward.1} parent=0 // pred_check
    _
  $region11: #{lstm_direct_forward.1} parent=0 // pred_check_branch
    %22 = sbr.rel (0) target = $region13
  $region12: #{lstm_direct_forward.1} parent=0 // pred_region
    _
  $region13: #{lstm_direct_forward.1} parent=0 // pred_fallthru
    _
  // Predicated region
  $region14: #{lstm_direct_forward.1} parent=0 // pred_check
    _
  $region15: #{lstm_direct_forward.1} parent=0 // pred_check_branch
    %24 = sbr.rel (0) target = $region17
  $region16: #{lstm_direct_forward.1} parent=0 // pred_region
    _
  $region17: #{lstm_direct_forward.1} parent=0 // pred_fallthru
    _
  // Predicated region
  $region18: #{lstm_direct_forward.1} parent=0 // pred_check
    _
  $region19: #{lstm_direct_forward.1} parent=0 // pred_check_branch
    %26 = sbr.rel (0) target = $region21
  $region20: #{lstm_direct_forward.1} parent=0 // pred_region
    _
  $region21: #{lstm_direct_forward.1} parent=0 // pred_fallthru
    _
  // Predicated region
  $region22: #{lstm_direct_forward.1} parent=0 // pred_check
    _
  $region23: #{lstm_direct_forward.1} parent=0 // pred_check_branch
    %28 = sbr.rel (0) target = $region25
  $region24: #{lstm_direct_forward.1} parent=0 // pred_region
    _
  $region25: #{lstm_direct_forward.1} parent=0 // pred_fallthru
    _
  // Predicated region
  $region26: #{lstm_direct_forward.1} parent=0 // pred_check
    _
  $region27: #{lstm_direct_forward.1} parent=0 // pred_check_branch
    %30 = sbr.rel (0) target = $region29
  $region28: #{lstm_direct_forward.1} parent=0 // pred_region
    _
  $region29: #{lstm_direct_forward.1} parent=0 // pred_fallthru
    _
  // Predicated region
  $region30: #{lstm_direct_forward.1} parent=0 // pred_check
    _
  $region31: #{lstm_direct_forward.1} parent=0 // pred_check_branch
    %32 = sbr.rel (0) target = $region33
  $region32: #{lstm_direct_forward.1} parent=0 // pred_region
    _
  $region33: #{lstm_direct_forward.1} parent=0 // pred_fallthru
    _
  // Predicated region
  $region34: #{lstm_direct_forward.1} parent=0 // pred_check
    _
  $region35: #{lstm_direct_forward.1} parent=0 // pred_check_branch
    %34 = sbr.rel (0) target = $region37
  $region36: #{lstm_direct_forward.1} parent=0 // pred_region
    _
  $region37: #{lstm_direct_forward.1} parent=0 // pred_fallthru
    _
  // Predicated region
  $region38: #{lstm_direct_forward.1} parent=0 // pred_check
    _
  $region39: #{lstm_direct_forward.1} parent=0 // pred_check_branch
    %36 = sbr.rel (0) target = $region41
  $region40: #{lstm_direct_forward.1} parent=0 // pred_region
    _
  $region41: #{lstm_direct_forward.1} parent=0 // pred_fallthru
    _
  // Predicated region
  $region42: #{lstm_direct_forward.1} parent=0 // pred_check
    _
  $region43: #{lstm_direct_forward.1} parent=0 // pred_check_branch
    %38 = sbr.rel (0) target = $region45
  $region44: #{lstm_direct_forward.1} parent=0 // pred_region
    _
  $region45: #{lstm_direct_forward.1} parent=0 // pred_fallthru
    _
  // Predicated region
  $region46: #{lstm_direct_forward.1} parent=0 // pred_check
    _
  $region47: #{lstm_direct_forward.1} parent=0 // pred_check_branch
    %40 = sbr.rel (0) target = $region49
  $region48: #{lstm_direct_forward.1} parent=0 // pred_region
    _
  $region49: #{lstm_direct_forward.1} parent=0 // pred_fallthru
    _
  %v41 = vld [vmem:[%s0] sm:$0x1]
  %v42 = vld [vmem:[%s0 + $0x8] sm:$0x1]
  %v43 = vld [vmem:[%s0 + $0x1] sm:$0x1]
  %v44 = vld [vmem:[%s0 + $0x9] sm:$0x1]
  %v45 = vld [vmem:[%s0 + $0x2] sm:$0x1]
  %v46 = vld [vmem:[%s0 + $0xa] sm:$0x1]
  %v47 = vld [vmem:[%s0 + $0x3] sm:$0x1]
  %v48 = vld [vmem:[%s0 + $0xb] sm:$0x1]
  %v49 = vld [vmem:[%s0 + $0x4] sm:$0x1]
  %v50 = vld [vmem:[%s0 + $0xc] sm:$0x1]
  %v51 = vld [vmem:[%s0 + $0x5] sm:$0x1]
  %v52 = vld [vmem:[%s0 + $0xd] sm:$0x1]
  %v53 = vld [vmem:[%s0 + $0x6] sm:$0x1]
  %v54 = vld [vmem:[%s0 + $0xe] sm:$0x1]
  %v55 = vld [vmem:[%s0 + $0x7] sm:$0x1]
  %v56 = vld [vmem:[%s0 + $0xf] sm:$0x1]
  %v59 = vrot.slane %v42, 7
  %vm60 = vcmask 1041409
  %v61 = vsel %vm60, %v59, %v41
  %v65 = vrot.slane %v43, 6
  %v66 = vrot.slane %v44, 5
  %vm67 = vcmask 1043459
  %v68 = vsel %vm67, %v66, %v65
  %v72 = vrot.slane %v45, 4
  %v73 = vrot.slane %v46, 3
  %vm74 = vcmask 1045509
  %v75 = vsel %vm74, %v73, %v72
  %v79 = vrot.slane %v47, 2
  %v80 = vrot.slane %v48, 1
  %vm81 = vcmask 1047559
  %v82 = vsel %vm81, %v80, %v79
  %v86 = vrot.slane %v50, 7
  %v87 = vsel %vm60, %v86, %v49
  %v91 = vrot.slane %v51, 6
  %v92 = vrot.slane %v52, 5
  %v93 = vsel %vm67, %v92, %v91
  %v97 = vrot.slane %v53, 4
  %v98 = vrot.slane %v54, 3
  %v99 = vsel %vm74, %v98, %v97
  %v103 = vrot.slane %v55, 2
  %v104 = vrot.slane %v56, 1
  %v105 = vsel %vm81, %v104, %v103
  %vm107 = vcmask 1041408
  %v108 = vsel %vm107, %v61, %v68
  %vm109 = vcmask 1043456
  %v110 = vsel %vm109, %v108, %v75
  %vm111 = vcmask 1045504
  %v112 = vsel %vm111, %v110, %v82
  %v113 = vsel %vm107, %v87, %v93
  %v114 = vsel %vm109, %v113, %v99
  %v115 = vsel %vm111, %v114, %v105
  %v116 = vld [vmem:[%s1] sm:$0xff]
  %v117 = vld [vmem:[%s1 + $0x8] sm:$0xff]
  %v118 = vld [vmem:[%s2] sm:$0xff]
  %v119 = vld [vmem:[%s2 + $0x8] sm:$0xff]
  %v120 = vld [vmem:[%s3] sm:$0x1]
  %v122 = vlaneseq
  %v123 = vshrl.u32 %v122, 7
  %v124 = vsub.s32 0, %v123
  %v125 = vrot.slane %v120, %v124
  %vm127 = vcmask 130048
  %v129 = vsel %vm127, %v112, 0
  %v132 = vsel %vm127, %v115, 0
  %134 = vmatprep.subr.mxu0 0.0
  %135 = vmatpush1.msra.mxu0 %v116
  %136 = vmatprep.subr.mxu0 0.0
  %137 = vmatpush1.msra.mxu0 %v117
  %138 = vmatprep.subr.mxu0 0.0
  %139 = vmatpush1.msra.mxu0 0.0
  %140 = vmatprep.subr.mxu0 0.0
  %141 = vmatpush1.msra.mxu0 0.0
  %142 = vmatprep.subr.mxu0 0.0
  %143 = vmatpush1.msra.mxu0 0.0
  %144 = vmatprep.subr.mxu0 0.0
  %145 = vmatpush1.msra.mxu0 0.0
  %146 = vmatprep.subr.mxu0 0.0
  %147 = vmatpush1.msra.mxu0 0.0
  %148 = vmatprep.subr.mxu0 0.0
  %149 = vmatpush1.msra.mxu0 0.0
  %150 = vmatprep.subr.mxu0 0.0
  %151 = vmatpush1.msra.mxu0 0.0
  %152 = vmatprep.subr.mxu0 0.0
  %153 = vmatpush1.msra.mxu0 0.0
  %154 = vmatprep.subr.mxu0 0.0
  %155 = vmatpush1.msra.mxu0 0.0
  %156 = vmatprep.subr.mxu0 0.0
  %157 = vmatpush1.msra.mxu0 0.0
  %158 = vmatprep.subr.mxu0 0.0
  %159 = vmatpush1.msra.mxu0 0.0
  %160 = vmatprep.subr.mxu0 0.0
  %161 = vmatpush1.msra.mxu0 0.0
  %162 = vmatprep.subr.mxu0 0.0
  %163 = vmatpush1.msra.mxu0 0.0
  %164 = vmatprep.subr.mxu0 0.0
  %165 = vmatpush1.msra.mxu0 0.0
  %166 = vmatprep.subr.mxu0 0.0
  %167 = vmatpush1.msra.mxu0 0.0
  %168 = vmatprep.subr.mxu0 0.0
  %169 = vmatpush1.msra.mxu0 0.0
  %170 = vmatprep.subr.mxu0 0.0
  %171 = vmatpush1.msra.mxu0 0.0
  %172 = vmatprep.subr.mxu0 0.0
  %173 = vmatpush1.msra.mxu0 0.0
  %174 = vmatprep.subr.mxu0 0.0
  %175 = vmatpush1.msra.mxu0 0.0
  %176 = vmatprep.subr.mxu0 0.0
  %177 = vmatpush1.msra.mxu0 0.0
  %178 = vmatprep.subr.mxu0 0.0
  %179 = vmatpush1.msra.mxu0 0.0
  %180 = vmatprep.subr.mxu0 0.0
  %181 = vmatpush1.msra.mxu0 0.0
  %182 = vmatprep.subr.mxu0 0.0
  %183 = vmatpush1.msra.mxu0 0.0
  %184 = vmatprep.subr.mxu0 0.0
  %185 = vmatpush1.msra.mxu0 0.0
  %186 = vmatprep.subr.mxu0 0.0
  %187 = vmatpush1.msra.mxu0 0.0
  %188 = vmatprep.subr.mxu0 0.0
  %189 = vmatpush1.msra.mxu0 0.0
  %190 = vmatprep.subr.mxu0 0.0
  %191 = vmatpush1.msra.mxu0 0.0
  %192 = vmatprep.subr.mxu0 0.0
  %193 = vmatpush1.msra.mxu0 0.0
  %194 = vmatprep.subr.mxu0 0.0
  %195 = vmatpush1.msra.mxu0 0.0
  %196 = vmatprep.subr.mxu0 0.0
  %197 = vmatpush1.msra.mxu0 0.0
  %198 = vmatprep.mubr.f32.mxu0 0.0
  %199 = vmatmul.mubr.f32.gmra.mrb[0].mxu0 %v129
  %v200 = vpop.f32.mrb[0].mxu0
  %v201 = vadd.f32 %v125, %v200
  %v202 = vpop.f32.mrb[0].mxu0
  %203 = vmatprep.mubr.f32.mxu0 0.0
  %204 = vmatmul.mubr.f32.gmra.mrb[0].mxu0 %v132
  %v205 = vpop.f32.mrb[0].mxu0
  %v206 = vadd.f32 %v125, %v205
  %v207 = vpop.f32.mrb[0].mxu0
  %208 = vdwg.mxu0
  %v210 = vsel %vm127, 0.0, 0
  %212 = vmatprep.subr.mxu0 0.0
  %213 = vmatpush1.msra.mxu0 %v118
  %214 = vmatprep.subr.mxu0 0.0
  %215 = vmatpush1.msra.mxu0 %v119
  %216 = vmatprep.subr.mxu0 0.0
  %217 = vmatpush1.msra.mxu0 0.0
  %218 = vmatprep.subr.mxu0 0.0
  %219 = vmatpush1.msra.mxu0 0.0
  %220 = vmatprep.subr.mxu0 0.0
  %221 = vmatpush1.msra.mxu0 0.0
  %222 = vmatprep.subr.mxu0 0.0
  %223 = vmatpush1.msra.mxu0 0.0
  %224 = vmatprep.subr.mxu0 0.0
  %225 = vmatpush1.msra.mxu0 0.0
  %226 = vmatprep.subr.mxu0 0.0
  %227 = vmatpush1.msra.mxu0 0.0
  %228 = vmatprep.subr.mxu0 0.0
  %229 = vmatpush1.msra.mxu0 0.0
  %230 = vmatprep.subr.mxu0 0.0
  %231 = vmatpush1.msra.mxu0 0.0
  %232 = vmatprep.subr.mxu0 0.0
  %233 = vmatpush1.msra.mxu0 0.0
  %234 = vmatprep.subr.mxu0 0.0
  %235 = vmatpush1.msra.mxu0 0.0
  %236 = vmatprep.subr.mxu0 0.0
  %237 = vmatpush1.msra.mxu0 0.0
  %238 = vmatprep.subr.mxu0 0.0
  %239 = vmatpush1.msra.mxu0 0.0
  %240 = vmatprep.subr.mxu0 0.0
  %241 = vmatpush1.msra.mxu0 0.0
  %242 = vmatprep.subr.mxu0 0.0
  %243 = vmatpush1.msra.mxu0 0.0
  %244 = vmatprep.subr.mxu0 0.0
  %245 = vmatpush1.msra.mxu0 0.0
  %246 = vmatprep.subr.mxu0 0.0
  %247 = vmatpush1.msra.mxu0 0.0
  %248 = vmatprep.subr.mxu0 0.0
  %249 = vmatpush1.msra.mxu0 0.0
  %250 = vmatprep.subr.mxu0 0.0
  %251 = vmatpush1.msra.mxu0 0.0
  %252 = vmatprep.subr.mxu0 0.0
  %253 = vmatpush1.msra.mxu0 0.0
  %254 = vmatprep.subr.mxu0 0.0
  %255 = vmatpush1.msra.mxu0 0.0
  %256 = vmatprep.subr.mxu0 0.0
  %257 = vmatpush1.msra.mxu0 0.0
  %258 = vmatprep.subr.mxu0 0.0
  %259 = vmatpush1.msra.mxu0 0.0
  %260 = vmatprep.subr.mxu0 0.0
  %261 = vmatpush1.msra.mxu0 0.0
  %262 = vmatprep.subr.mxu0 0.0
  %263 = vmatpush1.msra.mxu0 0.0
  %264 = vmatprep.subr.mxu0 0.0
  %265 = vmatpush1.msra.mxu0 0.0
  %266 = vmatprep.subr.mxu0 0.0
  %267 = vmatpush1.msra.mxu0 0.0
  %268 = vmatprep.subr.mxu0 0.0
  %269 = vmatpush1.msra.mxu0 0.0
  %270 = vmatprep.subr.mxu0 0.0
  %271 = vmatpush1.msra.mxu0 0.0
  %272 = vmatprep.subr.mxu0 0.0
  %273 = vmatpush1.msra.mxu0 0.0
  %274 = vmatprep.subr.mxu0 0.0
  %275 = vmatpush1.msra.mxu0 0.0
  %276 = vmatprep.mubr.f32.mxu0 0.0
  %277 = vmatmul.mubr.f32.gmra.mrb[0].mxu0 %v210
  %v278 = vpop.f32.mrb[0].mxu0
  %v279 = vadd.f32 0.0, %v278
  %v280 = vpop.f32.mrb[0].mxu0
  %281 = vdwg.mxu0
  %v282 = vadd.f32 %v201, %v279
  %v283 = vxor.u32 %v282, 2147483648
  %v284 = vmul.f32 %v283, 1.442695
  %v285 = vpow.pop %v284
  %v286 = vadd.f32 %v285, 1.0
  %v287 = vrcp.pop %v286
  %v288 = vmul.f32 1.0, %v287
  %v289 = vmul.f32 %v288, 2.0
  %v290 = vsub.f32 %v289, 1.0
  %v291 = vmul.f32 %v288, 0.0
  %293 = vrot.lane.b32.xlu0 %v290, 96
  %v294 = vpop.permute.xlu0 %293
  %v296 = vmul.f32 %v288, %v294
  %298 = vrot.lane.b32.xlu0 %v296, 16
  %v299 = vpop.permute.xlu0 %298
  %v301 = vadd.f32 %v291, %v299
  %v302 = vtanh.pop %v301
  %304 = vrot.lane.b32.xlu0 %v302, 32
  %v305 = vpop.permute.xlu0 %304
  %v307 = vmul.f32 %v288, %v305
  %309 = vrot.lane.b32.xlu0 %v307, 80
  %v310 = vpop.permute.xlu0 %309
  %v311 = vsel %vm127, %v310, 0
  %313 = vmatprep.subr.mxu0 0.0
  %314 = vmatpush1.msra.mxu0 %v118
  %315 = vmatprep.subr.mxu0 0.0
  %316 = vmatpush1.msra.mxu0 %v119
  %317 = vmatprep.subr.mxu0 0.0
  %318 = vmatpush1.msra.mxu0 0.0
  %319 = vmatprep.subr.mxu0 0.0
  %320 = vmatpush1.msra.mxu0 0.0
  %321 = vmatprep.subr.mxu0 0.0
  %322 = vmatpush1.msra.mxu0 0.0
  %323 = vmatprep.subr.mxu0 0.0
  %324 = vmatpush1.msra.mxu0 0.0
  %325 = vmatprep.subr.mxu0 0.0
  %326 = vmatpush1.msra.mxu0 0.0
  %327 = vmatprep.subr.mxu0 0.0
  %328 = vmatpush1.msra.mxu0 0.0
  %329 = vmatprep.subr.mxu0 0.0
  %330 = vmatpush1.msra.mxu0 0.0
  %331 = vmatprep.subr.mxu0 0.0
  %332 = vmatpush1.msra.mxu0 0.0
  %333 = vmatprep.subr.mxu0 0.0
  %334 = vmatpush1.msra.mxu0 0.0
  %335 = vmatprep.subr.mxu0 0.0
  %336 = vmatpush1.msra.mxu0 0.0
  %337 = vmatprep.subr.mxu0 0.0
  %338 = vmatpush1.msra.mxu0 0.0
  %339 = vmatprep.subr.mxu0 0.0
  %340 = vmatpush1.msra.mxu0 0.0
  %341 = vmatprep.subr.mxu0 0.0
  %342 = vmatpush1.msra.mxu0 0.0
  %343 = vmatprep.subr.mxu0 0.0
  %344 = vmatpush1.msra.mxu0 0.0
  %345 = vmatprep.subr.mxu0 0.0
  %346 = vmatpush1.msra.mxu0 0.0
  %347 = vmatprep.subr.mxu0 0.0
  %348 = vmatpush1.msra.mxu0 0.0
  %349 = vmatprep.subr.mxu0 0.0
  %350 = vmatpush1.msra.mxu0 0.0
  %351 = vmatprep.subr.mxu0 0.0
  %352 = vmatpush1.msra.mxu0 0.0
  %353 = vmatprep.subr.mxu0 0.0
  %354 = vmatpush1.msra.mxu0 0.0
  %355 = vmatprep.subr.mxu0 0.0
  %356 = vmatpush1.msra.mxu0 0.0
  %357 = vmatprep.subr.mxu0 0.0
  %358 = vmatpush1.msra.mxu0 0.0
  %359 = vmatprep.subr.mxu0 0.0
  %360 = vmatpush1.msra.mxu0 0.0
  %361 = vmatprep.subr.mxu0 0.0
  %362 = vmatpush1.msra.mxu0 0.0
  %363 = vmatprep.subr.mxu0 0.0
  %364 = vmatpush1.msra.mxu0 0.0
  %365 = vmatprep.subr.mxu0 0.0
  %366 = vmatpush1.msra.mxu0 0.0
  %367 = vmatprep.subr.mxu0 0.0
  %368 = vmatpush1.msra.mxu0 0.0
  %369 = vmatprep.subr.mxu0 0.0
  %370 = vmatpush1.msra.mxu0 0.0
  %371 = vmatprep.subr.mxu0 0.0
  %372 = vmatpush1.msra.mxu0 0.0
  %373 = vmatprep.subr.mxu0 0.0
  %374 = vmatpush1.msra.mxu0 0.0
  %375 = vmatprep.subr.mxu0 0.0
  %376 = vmatpush1.msra.mxu0 0.0
  %377 = vmatprep.mubr.f32.mxu0 0.0
  %378 = vmatmul.mubr.f32.gmra.mrb[0].mxu0 %v311
  %v379 = vpop.f32.mrb[0].mxu0
  %v380 = vadd.f32 0.0, %v379
  %v381 = vpop.f32.mrb[0].mxu0
  %382 = vdwg.mxu0
  %v384 = vrot.slane %v380, 6
  %v386 = vadd.f32 %v201, %v384
  %v387 = vxor.u32 %v386, 2147483648
  %v388 = vmul.f32 %v387, 1.442695
  %v389 = vpow.pop %v388
  %v390 = vadd.f32 %v389, 1.0
  %v391 = vrcp.pop %v390
  %v392 = vmul.f32 1.0, %v391
  %v393 = vmul.f32 %v392, 2.0
  %v394 = vsub.f32 %v393, 1.0
  %v396 = vrot.slane %v301, 6
  %v398 = vmul.f32 %v392, %v396
  %400 = vrot.lane.b32.xlu0 %v394, 96
  %v401 = vpop.permute.xlu0 %400
  %v403 = vmul.f32 %v392, %v401
  %405 = vrot.lane.b32.xlu0 %v403, 16
  %v406 = vpop.permute.xlu0 %405
  %v408 = vadd.f32 %v398, %v406
  %v409 = vtanh.pop %v408
  %411 = vrot.lane.b32.xlu0 %v409, 32
  %v412 = vpop.permute.xlu0 %411
  %v414 = vmul.f32 %v392, %v412
  %v416 = vrot.slane %v414, 2
  %417 = vrot.lane.b32.xlu0 %v416, 80
  %v418 = vpop.permute.xlu0 %417
  %v419 = vsel %vm127, %v418, 0
  %421 = vmatprep.subr.mxu0 0.0
  %422 = vmatpush1.msra.mxu0 %v118
  %423 = vmatprep.subr.mxu0 0.0
  %424 = vmatpush1.msra.mxu0 %v119
  %425 = vmatprep.subr.mxu0 0.0
  %426 = vmatpush1.msra.mxu0 0.0
  %427 = vmatprep.subr.mxu0 0.0
  %428 = vmatpush1.msra.mxu0 0.0
  %429 = vmatprep.subr.mxu0 0.0
  %430 = vmatpush1.msra.mxu0 0.0
  %431 = vmatprep.subr.mxu0 0.0
  %432 = vmatpush1.msra.mxu0 0.0
  %433 = vmatprep.subr.mxu0 0.0
  %434 = vmatpush1.msra.mxu0 0.0
  %435 = vmatprep.subr.mxu0 0.0
  %436 = vmatpush1.msra.mxu0 0.0
  %437 = vmatprep.subr.mxu0 0.0
  %438 = vmatpush1.msra.mxu0 0.0
  %439 = vmatprep.subr.mxu0 0.0
  %440 = vmatpush1.msra.mxu0 0.0
  %441 = vmatprep.subr.mxu0 0.0
  %442 = vmatpush1.msra.mxu0 0.0
  %443 = vmatprep.subr.mxu0 0.0
  %444 = vmatpush1.msra.mxu0 0.0
  %445 = vmatprep.subr.mxu0 0.0
  %446 = vmatpush1.msra.mxu0 0.0
  %447 = vmatprep.subr.mxu0 0.0
  %448 = vmatpush1.msra.mxu0 0.0
  %449 = vmatprep.subr.mxu0 0.0
  %450 = vmatpush1.msra.mxu0 0.0
  %451 = vmatprep.subr.mxu0 0.0
  %452 = vmatpush1.msra.mxu0 0.0
  %453 = vmatprep.subr.mxu0 0.0
  %454 = vmatpush1.msra.mxu0 0.0
  %455 = vmatprep.subr.mxu0 0.0
  %456 = vmatpush1.msra.mxu0 0.0
  %457 = vmatprep.subr.mxu0 0.0
  %458 = vmatpush1.msra.mxu0 0.0
  %459 = vmatprep.subr.mxu0 0.0
  %460 = vmatpush1.msra.mxu0 0.0
  %461 = vmatprep.subr.mxu0 0.0
  %462 = vmatpush1.msra.mxu0 0.0
  %463 = vmatprep.subr.mxu0 0.0
  %464 = vmatpush1.msra.mxu0 0.0
  %465 = vmatprep.subr.mxu0 0.0
  %466 = vmatpush1.msra.mxu0 0.0
  %467 = vmatprep.subr.mxu0 0.0
  %468 = vmatpush1.msra.mxu0 0.0
  %469 = vmatprep.subr.mxu0 0.0
  %470 = vmatpush1.msra.mxu0 0.0
  %471 = vmatprep.subr.mxu0 0.0
  %472 = vmatpush1.msra.mxu0 0.0
  %473 = vmatprep.subr.mxu0 0.0
  %474 = vmatpush1.msra.mxu0 0.0
  %475 = vmatprep.subr.mxu0 0.0
  %476 = vmatpush1.msra.mxu0 0.0
  %477 = vmatprep.subr.mxu0 0.0
  %478 = vmatpush1.msra.mxu0 0.0
  %479 = vmatprep.subr.mxu0 0.0
  %480 = vmatpush1.msra.mxu0 0.0
  %481 = vmatprep.subr.mxu0 0.0
  %482 = vmatpush1.msra.mxu0 0.0
  %483 = vmatprep.subr.mxu0 0.0
  %484 = vmatpush1.msra.mxu0 0.0
  %485 = vmatprep.mubr.f32.mxu0 0.0
  %486 = vmatmul.mubr.f32.gmra.mrb[0].mxu0 %v419
  %v487 = vpop.f32.mrb[0].mxu0
  %v488 = vadd.f32 0.0, %v487
  %v489 = vpop.f32.mrb[0].mxu0
  %490 = vdwg.mxu0
  %v492 = vrot.slane %v488, 4
  %v494 = vadd.f32 %v201, %v492
  %v495 = vxor.u32 %v494, 2147483648
  %v496 = vmul.f32 %v495, 1.442695
  %v497 = vpow.pop %v496
  %v498 = vadd.f32 %v497, 1.0
  %v499 = vrcp.pop %v498
  %v500 = vmul.f32 1.0, %v499
  %v501 = vmul.f32 %v500, 2.0
  %v502 = vsub.f32 %v501, 1.0
  %v504 = vrot.slane %v408, 6
  %v506 = vmul.f32 %v500, %v504
  %508 = vrot.lane.b32.xlu0 %v502, 96
  %v509 = vpop.permute.xlu0 %508
  %v511 = vmul.f32 %v500, %v509
  %513 = vrot.lane.b32.xlu0 %v511, 16
  %v514 = vpop.permute.xlu0 %513
  %v516 = vadd.f32 %v506, %v514
  %v517 = vtanh.pop %v516
  %519 = vrot.lane.b32.xlu0 %v517, 32
  %v520 = vpop.permute.xlu0 %519
  %v522 = vmul.f32 %v500, %v520
  %v524 = vrot.slane %v522, 4
  %525 = vrot.lane.b32.xlu0 %v524, 80
  %v526 = vpop.permute.xlu0 %525
  %v527 = vsel %vm127, %v526, 0
  %529 = vmatprep.subr.mxu0 0.0
  %530 = vmatpush1.msra.mxu0 %v118
  %531 = vmatprep.subr.mxu0 0.0
  %532 = vmatpush1.msra.mxu0 %v119
  %533 = vmatprep.subr.mxu0 0.0
  %534 = vmatpush1.msra.mxu0 0.0
  %535 = vmatprep.subr.mxu0 0.0
  %536 = vmatpush1.msra.mxu0 0.0
  %537 = vmatprep.subr.mxu0 0.0
  %538 = vmatpush1.msra.mxu0 0.0
  %539 = vmatprep.subr.mxu0 0.0
  %540 = vmatpush1.msra.mxu0 0.0
  %541 = vmatprep.subr.mxu0 0.0
  %542 = vmatpush1.msra.mxu0 0.0
  %543 = vmatprep.subr.mxu0 0.0
  %544 = vmatpush1.msra.mxu0 0.0
  %545 = vmatprep.subr.mxu0 0.0
  %546 = vmatpush1.msra.mxu0 0.0
  %547 = vmatprep.subr.mxu0 0.0
  %548 = vmatpush1.msra.mxu0 0.0
  %549 = vmatprep.subr.mxu0 0.0
  %550 = vmatpush1.msra.mxu0 0.0
  %551 = vmatprep.subr.mxu0 0.0
  %552 = vmatpush1.msra.mxu0 0.0
  %553 = vmatprep.subr.mxu0 0.0
  %554 = vmatpush1.msra.mxu0 0.0
  %555 = vmatprep.subr.mxu0 0.0
  %556 = vmatpush1.msra.mxu0 0.0
  %557 = vmatprep.subr.mxu0 0.0
  %558 = vmatpush1.msra.mxu0 0.0
  %559 = vmatprep.subr.mxu0 0.0
  %560 = vmatpush1.msra.mxu0 0.0
  %561 = vmatprep.subr.mxu0 0.0
  %562 = vmatpush1.msra.mxu0 0.0
  %563 = vmatprep.subr.mxu0 0.0
  %564 = vmatpush1.msra.mxu0 0.0
  %565 = vmatprep.subr.mxu0 0.0
  %566 = vmatpush1.msra.mxu0 0.0
  %567 = vmatprep.subr.mxu0 0.0
  %568 = vmatpush1.msra.mxu0 0.0
  %569 = vmatprep.subr.mxu0 0.0
  %570 = vmatpush1.msra.mxu0 0.0
  %571 = vmatprep.subr.mxu0 0.0
  %572 = vmatpush1.msra.mxu0 0.0
  %573 = vmatprep.subr.mxu0 0.0
  %574 = vmatpush1.msra.mxu0 0.0
  %575 = vmatprep.subr.mxu0 0.0
  %576 = vmatpush1.msra.mxu0 0.0
  %577 = vmatprep.subr.mxu0 0.0
  %578 = vmatpush1.msra.mxu0 0.0
  %579 = vmatprep.subr.mxu0 0.0
  %580 = vmatpush1.msra.mxu0 0.0
  %581 = vmatprep.subr.mxu0 0.0
  %582 = vmatpush1.msra.mxu0 0.0
  %583 = vmatprep.subr.mxu0 0.0
  %584 = vmatpush1.msra.mxu0 0.0
  %585 = vmatprep.subr.mxu0 0.0
  %586 = vmatpush1.msra.mxu0 0.0
  %587 = vmatprep.subr.mxu0 0.0
  %588 = vmatpush1.msra.mxu0 0.0
  %589 = vmatprep.subr.mxu0 0.0
  %590 = vmatpush1.msra.mxu0 0.0
  %591 = vmatprep.subr.mxu0 0.0
  %592 = vmatpush1.msra.mxu0 0.0
  %593 = vmatprep.mubr.f32.mxu0 0.0
  %594 = vmatmul.mubr.f32.gmra.mrb[0].mxu0 %v527
  %v595 = vpop.f32.mrb[0].mxu0
  %v596 = vadd.f32 0.0, %v595
  %v597 = vpop.f32.mrb[0].mxu0
  %598 = vdwg.mxu0
  %v600 = vrot.slane %v596, 2
  %v602 = vadd.f32 %v201, %v600
  %v603 = vxor.u32 %v602, 2147483648
  %v604 = vmul.f32 %v603, 1.442695
  %v605 = vpow.pop %v604
  %v606 = vadd.f32 %v605, 1.0
  %v607 = vrcp.pop %v606
  %v608 = vmul.f32 1.0, %v607
  %v609 = vmul.f32 %v608, 2.0
  %v610 = vsub.f32 %v609, 1.0
  %v612 = vrot.slane %v516, 6
  %v614 = vmul.f32 %v608, %v612
  %616 = vrot.lane.b32.xlu0 %v610, 96
  %v617 = vpop.permute.xlu0 %616
  %v619 = vmul.f32 %v608, %v617
  %621 = vrot.lane.b32.xlu0 %v619, 16
  %v622 = vpop.permute.xlu0 %621
  %v624 = vadd.f32 %v614, %v622
  %v625 = vtanh.pop %v624
  %627 = vrot.lane.b32.xlu0 %v625, 32
  %v628 = vpop.permute.xlu0 %627
  %v630 = vmul.f32 %v608, %v628
  %v632 = vrot.slane %v630, 6
  %633 = vrot.lane.b32.xlu0 %v632, 80
  %v634 = vpop.permute.xlu0 %633
  %v635 = vsel %vm127, %v634, 0
  %637 = vmatprep.subr.mxu0 0.0
  %638 = vmatpush1.msra.mxu0 %v118
  %639 = vmatprep.subr.mxu0 0.0
  %640 = vmatpush1.msra.mxu0 %v119
  %641 = vmatprep.subr.mxu0 0.0
  %642 = vmatpush1.msra.mxu0 0.0
  %643 = vmatprep.subr.mxu0 0.0
  %644 = vmatpush1.msra.mxu0 0.0
  %645 = vmatprep.subr.mxu0 0.0
  %646 = vmatpush1.msra.mxu0 0.0
  %647 = vmatprep.subr.mxu0 0.0
  %648 = vmatpush1.msra.mxu0 0.0
  %649 = vmatprep.subr.mxu0 0.0
  %650 = vmatpush1.msra.mxu0 0.0
  %651 = vmatprep.subr.mxu0 0.0
  %652 = vmatpush1.msra.mxu0 0.0
  %653 = vmatprep.subr.mxu0 0.0
  %654 = vmatpush1.msra.mxu0 0.0
  %655 = vmatprep.subr.mxu0 0.0
  %656 = vmatpush1.msra.mxu0 0.0
  %657 = vmatprep.subr.mxu0 0.0
  %658 = vmatpush1.msra.mxu0 0.0
  %659 = vmatprep.subr.mxu0 0.0
  %660 = vmatpush1.msra.mxu0 0.0
  %661 = vmatprep.subr.mxu0 0.0
  %662 = vmatpush1.msra.mxu0 0.0
  %663 = vmatprep.subr.mxu0 0.0
  %664 = vmatpush1.msra.mxu0 0.0
  %665 = vmatprep.subr.mxu0 0.0
  %666 = vmatpush1.msra.mxu0 0.0
  %667 = vmatprep.subr.mxu0 0.0
  %668 = vmatpush1.msra.mxu0 0.0
  %669 = vmatprep.subr.mxu0 0.0
  %670 = vmatpush1.msra.mxu0 0.0
  %671 = vmatprep.subr.mxu0 0.0
  %672 = vmatpush1.msra.mxu0 0.0
  %673 = vmatprep.subr.mxu0 0.0
  %674 = vmatpush1.msra.mxu0 0.0
  %675 = vmatprep.subr.mxu0 0.0
  %676 = vmatpush1.msra.mxu0 0.0
  %677 = vmatprep.subr.mxu0 0.0
  %678 = vmatpush1.msra.mxu0 0.0
  %679 = vmatprep.subr.mxu0 0.0
  %680 = vmatpush1.msra.mxu0 0.0
  %681 = vmatprep.subr.mxu0 0.0
  %682 = vmatpush1.msra.mxu0 0.0
  %683 = vmatprep.subr.mxu0 0.0
  %684 = vmatpush1.msra.mxu0 0.0
  %685 = vmatprep.subr.mxu0 0.0
  %686 = vmatpush1.msra.mxu0 0.0
  %687 = vmatprep.subr.mxu0 0.0
  %688 = vmatpush1.msra.mxu0 0.0
  %689 = vmatprep.subr.mxu0 0.0
  %690 = vmatpush1.msra.mxu0 0.0
  %691 = vmatprep.subr.mxu0 0.0
  %692 = vmatpush1.msra.mxu0 0.0
  %693 = vmatprep.subr.mxu0 0.0
  %694 = vmatpush1.msra.mxu0 0.0
  %695 = vmatprep.subr.mxu0 0.0
  %696 = vmatpush1.msra.mxu0 0.0
  %697 = vmatprep.subr.mxu0 0.0
  %698 = vmatpush1.msra.mxu0 0.0
  %699 = vmatprep.subr.mxu0 0.0
  %700 = vmatpush1.msra.mxu0 0.0
  %701 = vmatprep.mubr.f32.mxu0 0.0
  %702 = vmatmul.mubr.f32.gmra.mrb[0].mxu0 %v635
  %v703 = vpop.f32.mrb[0].mxu0
  %v704 = vadd.f32 0.0, %v703
  %v705 = vpop.f32.mrb[0].mxu0
  %706 = vdwg.mxu0
  %v707 = vadd.f32 %v206, %v704
  %v708 = vxor.u32 %v707, 2147483648
  %v709 = vmul.f32 %v708, 1.442695
  %v710 = vpow.pop %v709
  %v711 = vadd.f32 %v710, 1.0
  %v712 = vrcp.pop %v711
  %v713 = vmul.f32 1.0, %v712
  %v714 = vmul.f32 %v713, 2.0
  %v715 = vsub.f32 %v714, 1.0
  %v717 = vrot.slane %v624, 6
  %v719 = vmul.f32 %v713, %v717
  %721 = vrot.lane.b32.xlu0 %v715, 96
  %v722 = vpop.permute.xlu0 %721
  %v724 = vmul.f32 %v713, %v722
  %726 = vrot.lane.b32.xlu0 %v724, 16
  %v727 = vpop.permute.xlu0 %726
  %v729 = vadd.f32 %v719, %v727
  %v730 = vtanh.pop %v729
  %732 = vrot.lane.b32.xlu0 %v730, 32
  %v733 = vpop.permute.xlu0 %732
  %v735 = vmul.f32 %v713, %v733
  %737 = vrot.lane.b32.xlu0 %v735, 80
  %v738 = vpop.permute.xlu0 %737
  %v739 = vsel %vm127, %v738, 0
  %741 = vmatprep.subr.mxu0 0.0
  %742 = vmatpush1.msra.mxu0 %v118
  %743 = vmatprep.subr.mxu0 0.0
  %744 = vmatpush1.msra.mxu0 %v119
  %745 = vmatprep.subr.mxu0 0.0
  %746 = vmatpush1.msra.mxu0 0.0
  %747 = vmatprep.subr.mxu0 0.0
  %748 = vmatpush1.msra.mxu0 0.0
  %749 = vmatprep.subr.mxu0 0.0
  %750 = vmatpush1.msra.mxu0 0.0
  %751 = vmatprep.subr.mxu0 0.0
  %752 = vmatpush1.msra.mxu0 0.0
  %753 = vmatprep.subr.mxu0 0.0
  %754 = vmatpush1.msra.mxu0 0.0
  %755 = vmatprep.subr.mxu0 0.0
  %756 = vmatpush1.msra.mxu0 0.0
  %757 = vmatprep.subr.mxu0 0.0
  %758 = vmatpush1.msra.mxu0 0.0
  %759 = vmatprep.subr.mxu0 0.0
  %760 = vmatpush1.msra.mxu0 0.0
  %761 = vmatprep.subr.mxu0 0.0
  %762 = vmatpush1.msra.mxu0 0.0
  %763 = vmatprep.subr.mxu0 0.0
  %764 = vmatpush1.msra.mxu0 0.0
  %765 = vmatprep.subr.mxu0 0.0
  %766 = vmatpush1.msra.mxu0 0.0
  %767 = vmatprep.subr.mxu0 0.0
  %768 = vmatpush1.msra.mxu0 0.0
  %769 = vmatprep.subr.mxu0 0.0
  %770 = vmatpush1.msra.mxu0 0.0
  %771 = vmatprep.subr.mxu0 0.0
  %772 = vmatpush1.msra.mxu0 0.0
  %773 = vmatprep.subr.mxu0 0.0
  %774 = vmatpush1.msra.mxu0 0.0
  %775 = vmatprep.subr.mxu0 0.0
  %776 = vmatpush1.msra.mxu0 0.0
  %777 = vmatprep.subr.mxu0 0.0
  %778 = vmatpush1.msra.mxu0 0.0
  %779 = vmatprep.subr.mxu0 0.0
  %780 = vmatpush1.msra.mxu0 0.0
  %781 = vmatprep.subr.mxu0 0.0
  %782 = vmatpush1.msra.mxu0 0.0
  %783 = vmatprep.subr.mxu0 0.0
  %784 = vmatpush1.msra.mxu0 0.0
  %785 = vmatprep.subr.mxu0 0.0
  %786 = vmatpush1.msra.mxu0 0.0
  %787 = vmatprep.subr.mxu0 0.0
  %788 = vmatpush1.msra.mxu0 0.0
  %789 = vmatprep.subr.mxu0 0.0
  %790 = vmatpush1.msra.mxu0 0.0
  %791 = vmatprep.subr.mxu0 0.0
  %792 = vmatpush1.msra.mxu0 0.0
  %793 = vmatprep.subr.mxu0 0.0
  %794 = vmatpush1.msra.mxu0 0.0
  %795 = vmatprep.subr.mxu0 0.0
  %796 = vmatpush1.msra.mxu0 0.0
  %797 = vmatprep.subr.mxu0 0.0
  %798 = vmatpush1.msra.mxu0 0.0
  %799 = vmatprep.subr.mxu0 0.0
  %800 = vmatpush1.msra.mxu0 0.0
  %801 = vmatprep.subr.mxu0 0.0
  %802 = vmatpush1.msra.mxu0 0.0
  %803 = vmatprep.subr.mxu0 0.0
  %804 = vmatpush1.msra.mxu0 0.0
  %805 = vmatprep.mubr.f32.mxu0 0.0
  %806 = vmatmul.mubr.f32.gmra.mrb[0].mxu0 %v739
  %v807 = vpop.f32.mrb[0].mxu0
  %v808 = vadd.f32 0.0, %v807
  %v809 = vpop.f32.mrb[0].mxu0
  %810 = vdwg.mxu0
  %v812 = vrot.slane %v808, 6
  %v814 = vadd.f32 %v206, %v812
  %v815 = vxor.u32 %v814, 2147483648
  %v816 = vmul.f32 %v815, 1.442695
  %v817 = vpow.pop %v816
  %v818 = vadd.f32 %v817, 1.0
  %v819 = vrcp.pop %v818
  %v820 = vmul.f32 1.0, %v819
  %v821 = vmul.f32 %v820, 2.0
  %v822 = vsub.f32 %v821, 1.0
  %v824 = vrot.slane %v729, 6
  %v826 = vmul.f32 %v820, %v824
  %828 = vrot.lane.b32.xlu0 %v822, 96
  %v829 = vpop.permute.xlu0 %828
  %v831 = vmul.f32 %v820, %v829
  %833 = vrot.lane.b32.xlu0 %v831, 16
  %v834 = vpop.permute.xlu0 %833
  %v836 = vadd.f32 %v826, %v834
  %v837 = vtanh.pop %v836
  %839 = vrot.lane.b32.xlu0 %v837, 32
  %v840 = vpop.permute.xlu0 %839
  %v842 = vmul.f32 %v820, %v840
  %v844 = vrot.slane %v842, 2
  %845 = vrot.lane.b32.xlu0 %v844, 80
  %v846 = vpop.permute.xlu0 %845
  %v847 = vsel %vm127, %v846, 0
  %849 = vmatprep.subr.mxu0 0.0
  %850 = vmatpush1.msra.mxu0 %v118
  %851 = vmatprep.subr.mxu0 0.0
  %852 = vmatpush1.msra.mxu0 %v119
  %853 = vmatprep.subr.mxu0 0.0
  %854 = vmatpush1.msra.mxu0 0.0
  %855 = vmatprep.subr.mxu0 0.0
  %856 = vmatpush1.msra.mxu0 0.0
  %857 = vmatprep.subr.mxu0 0.0
  %858 = vmatpush1.msra.mxu0 0.0
  %859 = vmatprep.subr.mxu0 0.0
  %860 = vmatpush1.msra.mxu0 0.0
  %861 = vmatprep.subr.mxu0 0.0
  %862 = vmatpush1.msra.mxu0 0.0
  %863 = vmatprep.subr.mxu0 0.0
  %864 = vmatpush1.msra.mxu0 0.0
  %865 = vmatprep.subr.mxu0 0.0
  %866 = vmatpush1.msra.mxu0 0.0
  %867 = vmatprep.subr.mxu0 0.0
  %868 = vmatpush1.msra.mxu0 0.0
  %869 = vmatprep.subr.mxu0 0.0
  %870 = vmatpush1.msra.mxu0 0.0
  %871 = vmatprep.subr.mxu0 0.0
  %872 = vmatpush1.msra.mxu0 0.0
  %873 = vmatprep.subr.mxu0 0.0
  %874 = vmatpush1.msra.mxu0 0.0
  %875 = vmatprep.subr.mxu0 0.0
  %876 = vmatpush1.msra.mxu0 0.0
  %877 = vmatprep.subr.mxu0 0.0
  %878 = vmatpush1.msra.mxu0 0.0
  %879 = vmatprep.subr.mxu0 0.0
  %880 = vmatpush1.msra.mxu0 0.0
  %881 = vmatprep.subr.mxu0 0.0
  %882 = vmatpush1.msra.mxu0 0.0
  %883 = vmatprep.subr.mxu0 0.0
  %884 = vmatpush1.msra.mxu0 0.0
  %885 = vmatprep.subr.mxu0 0.0
  %886 = vmatpush1.msra.mxu0 0.0
  %887 = vmatprep.subr.mxu0 0.0
  %888 = vmatpush1.msra.mxu0 0.0
  %889 = vmatprep.subr.mxu0 0.0
  %890 = vmatpush1.msra.mxu0 0.0
  %891 = vmatprep.subr.mxu0 0.0
  %892 = vmatpush1.msra.mxu0 0.0
  %893 = vmatprep.subr.mxu0 0.0
  %894 = vmatpush1.msra.mxu0 0.0
  %895 = vmatprep.subr.mxu0 0.0
  %896 = vmatpush1.msra.mxu0 0.0
  %897 = vmatprep.subr.mxu0 0.0
  %898 = vmatpush1.msra.mxu0 0.0
  %899 = vmatprep.subr.mxu0 0.0
  %900 = vmatpush1.msra.mxu0 0.0
  %901 = vmatprep.subr.mxu0 0.0
  %902 = vmatpush1.msra.mxu0 0.0
  %903 = vmatprep.subr.mxu0 0.0
  %904 = vmatpush1.msra.mxu0 0.0
  %905 = vmatprep.subr.mxu0 0.0
  %906 = vmatpush1.msra.mxu0 0.0
  %907 = vmatprep.subr.mxu0 0.0
  %908 = vmatpush1.msra.mxu0 0.0
  %909 = vmatprep.subr.mxu0 0.0
  %910 = vmatpush1.msra.mxu0 0.0
  %911 = vmatprep.subr.mxu0 0.0
  %912 = vmatpush1.msra.mxu0 0.0
  %913 = vmatprep.mubr.f32.mxu0 0.0
  %914 = vmatmul.mubr.f32.gmra.mrb[0].mxu0 %v847
  %v915 = vpop.f32.mrb[0].mxu0
  %v916 = vadd.f32 0.0, %v915
  %v917 = vpop.f32.mrb[0].mxu0
  %918 = vdwg.mxu0
  %v920 = vrot.slane %v916, 4
  %v922 = vadd.f32 %v206, %v920
  %v923 = vxor.u32 %v922, 2147483648
  %v924 = vmul.f32 %v923, 1.442695
  %v925 = vpow.pop %v924
  %v926 = vadd.f32 %v925, 1.0
  %v927 = vrcp.pop %v926
  %v928 = vmul.f32 1.0, %v927
  %v929 = vmul.f32 %v928, 2.0
  %v930 = vsub.f32 %v929, 1.0
  %v932 = vrot.slane %v836, 6
  %v934 = vmul.f32 %v928, %v932
  %936 = vrot.lane.b32.xlu0 %v930, 96
  %v937 = vpop.permute.xlu0 %936
  %v939 = vmul.f32 %v928, %v937
  %941 = vrot.lane.b32.xlu0 %v939, 16
  %v942 = vpop.permute.xlu0 %941
  %v944 = vadd.f32 %v934, %v942
  %v945 = vtanh.pop %v944
  %947 = vrot.lane.b32.xlu0 %v945, 32
  %v948 = vpop.permute.xlu0 %947
  %v950 = vmul.f32 %v928, %v948
  %v952 = vrot.slane %v950, 4
  %953 = vrot.lane.b32.xlu0 %v952, 80
  %v954 = vpop.permute.xlu0 %953
  %v955 = vsel %vm127, %v954, 0
  %957 = vmatprep.subr.mxu0 0.0
  %958 = vmatpush1.msra.mxu0 %v118
  %959 = vmatprep.subr.mxu0 0.0
  %960 = vmatpush1.msra.mxu0 %v119
  %961 = vmatprep.subr.mxu0 0.0
  %962 = vmatpush1.msra.mxu0 0.0
  %963 = vmatprep.subr.mxu0 0.0
  %964 = vmatpush1.msra.mxu0 0.0
  %965 = vmatprep.subr.mxu0 0.0
  %966 = vmatpush1.msra.mxu0 0.0
  %967 = vmatprep.subr.mxu0 0.0
  %968 = vmatpush1.msra.mxu0 0.0
  %969 = vmatprep.subr.mxu0 0.0
  %970 = vmatpush1.msra.mxu0 0.0
  %971 = vmatprep.subr.mxu0 0.0
  %972 = vmatpush1.msra.mxu0 0.0
  %973 = vmatprep.subr.mxu0 0.0
  %974 = vmatpush1.msra.mxu0 0.0
  %975 = vmatprep.subr.mxu0 0.0
  %976 = vmatpush1.msra.mxu0 0.0
  %977 = vmatprep.subr.mxu0 0.0
  %978 = vmatpush1.msra.mxu0 0.0
  %979 = vmatprep.subr.mxu0 0.0
  %980 = vmatpush1.msra.mxu0 0.0
  %981 = vmatprep.subr.mxu0 0.0
  %982 = vmatpush1.msra.mxu0 0.0
  %983 = vmatprep.subr.mxu0 0.0
  %984 = vmatpush1.msra.mxu0 0.0
  %985 = vmatprep.subr.mxu0 0.0
  %986 = vmatpush1.msra.mxu0 0.0
  %987 = vmatprep.subr.mxu0 0.0
  %988 = vmatpush1.msra.mxu0 0.0
  %989 = vmatprep.subr.mxu0 0.0
  %990 = vmatpush1.msra.mxu0 0.0
  %991 = vmatprep.subr.mxu0 0.0
  %992 = vmatpush1.msra.mxu0 0.0
  %993 = vmatprep.subr.mxu0 0.0
  %994 = vmatpush1.msra.mxu0 0.0
  %995 = vmatprep.subr.mxu0 0.0
  %996 = vmatpush1.msra.mxu0 0.0
  %997 = vmatprep.subr.mxu0 0.0
  %998 = vmatpush1.msra.mxu0 0.0
  %999 = vmatprep.subr.mxu0 0.0
  %1000 = vmatpush1.msra.mxu0 0.0
  %1001 = vmatprep.subr.mxu0 0.0
  %1002 = vmatpush1.msra.mxu0 0.0
  %1003 = vmatprep.subr.mxu0 0.0
  %1004 = vmatpush1.msra.mxu0 0.0
  %1005 = vmatprep.subr.mxu0 0.0
  %1006 = vmatpush1.msra.mxu0 0.0
  %1007 = vmatprep.subr.mxu0 0.0
  %1008 = vmatpush1.msra.mxu0 0.0
  %1009 = vmatprep.subr.mxu0 0.0
  %1010 = vmatpush1.msra.mxu0 0.0
  %1011 = vmatprep.subr.mxu0 0.0
  %1012 = vmatpush1.msra.mxu0 0.0
  %1013 = vmatprep.subr.mxu0 0.0
  %1014 = vmatpush1.msra.mxu0 0.0
  %1015 = vmatprep.subr.mxu0 0.0
  %1016 = vmatpush1.msra.mxu0 0.0
  %1017 = vmatprep.subr.mxu0 0.0
  %1018 = vmatpush1.msra.mxu0 0.0
  %1019 = vmatprep.subr.mxu0 0.0
  %1020 = vmatpush1.msra.mxu0 0.0
  %1021 = vmatprep.mubr.f32.mxu0 0.0
  %1022 = vmatmul.mubr.f32.gmra.mrb[0].mxu0 %v955
  %v1023 = vpop.f32.mrb[0].mxu0
  %v1024 = vadd.f32 0.0, %v1023
  %v1025 = vpop.f32.mrb[0].mxu0
  %1026 = vdwg.mxu0
  %v1028 = vrot.slane %v1024, 2
  %v1030 = vadd.f32 %v206, %v1028
  %v1031 = vxor.u32 %v1030, 2147483648
  %v1032 = vmul.f32 %v1031, 1.442695
  %v1033 = vpow.pop %v1032
  %v1034 = vadd.f32 %v1033, 1.0
  %v1035 = vrcp.pop %v1034
  %v1036 = vmul.f32 1.0, %v1035
  %v1037 = vmul.f32 %v1036, 2.0
  %v1038 = vsub.f32 %v1037, 1.0
  %v1040 = vrot.slane %v944, 6
  %v1042 = vmul.f32 %v1036, %v1040
  %1044 = vrot.lane.b32.xlu0 %v1038, 96
  %v1045 = vpop.permute.xlu0 %1044
  %v1047 = vmul.f32 %v1036, %v1045
  %1049 = vrot.lane.b32.xlu0 %v1047, 16
  %v1050 = vpop.permute.xlu0 %1049
  %v1052 = vadd.f32 %v1042, %v1050
  %v1053 = vtanh.pop %v1052
  %1055 = vrot.lane.b32.xlu0 %v1053, 32
  %v1056 = vpop.permute.xlu0 %1055
  %v1058 = vmul.f32 %v1036, %v1056
  %v1059 = vsel %vm107, %v307, %v414
  %v1060 = vsel %vm109, %v1059, %v522
  %v1061 = vsel %vm111, %v1060, %v630
  %v1062 = vsel %vm107, %v735, %v842
  %v1063 = vsel %vm109, %v1062, %v950
  %v1064 = vsel %vm111, %v1063, %v1058
  %s1065 = scalar_lea.vmem %s1, 16
  %v1066 = vld [vmem:[%s1065] sm:$0xff]
  %v1067 = vld [vmem:[%s1065 + $0x8] sm:$0xff]
  %s1068 = scalar_lea.vmem %s2, 16
  %v1069 = vld [vmem:[%s1068] sm:$0xff]
  %v1070 = vld [vmem:[%s1068 + $0x8] sm:$0xff]
  %s1071 = scalar_lea.vmem %s3, 1
  %v1072 = vld [vmem:[%s1071] sm:$0x1]
  %v1074 = vlaneseq
  %v1075 = vshrl.u32 %v1074, 7
  %v1076 = vsub.s32 0, %v1075
  %v1077 = vrot.slane %v1072, %v1076
  %1081 = vrot.lane.b32.xlu0 %v1061, 80
  %v1082 = vpop.permute.xlu0 %1081
  %1083 = vrot.lane.b32.xlu0 %v1064, 80
  %v1084 = vpop.permute.xlu0 %1083
  %v1085 = vsel %vm127, %v1082, 0
  %v1087 = vsel %vm127, %v1084, 0
  %1089 = vmatprep.subr.mxu0 0.0
  %1090 = vmatpush1.msra.mxu0 %v1066
  %1091 = vmatprep.subr.mxu0 0.0
  %1092 = vmatpush1.msra.mxu0 %v1067
  %1093 = vmatprep.subr.mxu0 0.0
  %1094 = vmatpush1.msra.mxu0 0.0
  %1095 = vmatprep.subr.mxu0 0.0
  %1096 = vmatpush1.msra.mxu0 0.0
  %1097 = vmatprep.subr.mxu0 0.0
  %1098 = vmatpush1.msra.mxu0 0.0
  %1099 = vmatprep.subr.mxu0 0.0
  %1100 = vmatpush1.msra.mxu0 0.0
  %1101 = vmatprep.subr.mxu0 0.0
  %1102 = vmatpush1.msra.mxu0 0.0
  %1103 = vmatprep.subr.mxu0 0.0
  %1104 = vmatpush1.msra.mxu0 0.0
  %1105 = vmatprep.subr.mxu0 0.0
  %1106 = vmatpush1.msra.mxu0 0.0
  %1107 = vmatprep.subr.mxu0 0.0
  %1108 = vmatpush1.msra.mxu0 0.0
  %1109 = vmatprep.subr.mxu0 0.0
  %1110 = vmatpush1.msra.mxu0 0.0
  %1111 = vmatprep.subr.mxu0 0.0
  %1112 = vmatpush1.msra.mxu0 0.0
  %1113 = vmatprep.subr.mxu0 0.0
  %1114 = vmatpush1.msra.mxu0 0.0
  %1115 = vmatprep.subr.mxu0 0.0
  %1116 = vmatpush1.msra.mxu0 0.0
  %1117 = vmatprep.subr.mxu0 0.0
  %1118 = vmatpush1.msra.mxu0 0.0
  %1119 = vmatprep.subr.mxu0 0.0
  %1120 = vmatpush1.msra.mxu0 0.0
  %1121 = vmatprep.subr.mxu0 0.0
  %1122 = vmatpush1.msra.mxu0 0.0
  %1123 = vmatprep.subr.mxu0 0.0
  %1124 = vmatpush1.msra.mxu0 0.0
  %1125 = vmatprep.subr.mxu0 0.0
  %1126 = vmatpush1.msra.mxu0 0.0
  %1127 = vmatprep.subr.mxu0 0.0
  %1128 = vmatpush1.msra.mxu0 0.0
  %1129 = vmatprep.subr.mxu0 0.0
  %1130 = vmatpush1.msra.mxu0 0.0
  %1131 = vmatprep.subr.mxu0 0.0
  %1132 = vmatpush1.msra.mxu0 0.0
  %1133 = vmatprep.subr.mxu0 0.0
  %1134 = vmatpush1.msra.mxu0 0.0
  %1135 = vmatprep.subr.mxu0 0.0
  %1136 = vmatpush1.msra.mxu0 0.0
  %1137 = vmatprep.subr.mxu0 0.0
  %1138 = vmatpush1.msra.mxu0 0.0
  %1139 = vmatprep.subr.mxu0 0.0
  %1140 = vmatpush1.msra.mxu0 0.0
  %1141 = vmatprep.subr.mxu0 0.0
  %1142 = vmatpush1.msra.mxu0 0.0
  %1143 = vmatprep.subr.mxu0 0.0
  %1144 = vmatpush1.msra.mxu0 0.0
  %1145 = vmatprep.subr.mxu0 0.0
  %1146 = vmatpush1.msra.mxu0 0.0
  %1147 = vmatprep.subr.mxu0 0.0
  %1148 = vmatpush1.msra.mxu0 0.0
  %1149 = vmatprep.subr.mxu0 0.0
  %1150 = vmatpush1.msra.mxu0 0.0
  %1151 = vmatprep.subr.mxu0 0.0
  %1152 = vmatpush1.msra.mxu0 0.0
  %1153 = vmatprep.mubr.f32.mxu0 0.0
  %1154 = vmatmul.mubr.f32.gmra.mrb[0].mxu0 %v1085
  %v1155 = vpop.f32.mrb[0].mxu0
  %v1156 = vadd.f32 %v1077, %v1155
  %v1157 = vpop.f32.mrb[0].mxu0
  %1158 = vmatprep.mubr.f32.mxu0 0.0
  %1159 = vmatmul.mubr.f32.gmra.mrb[0].mxu0 %v1087
  %v1160 = vpop.f32.mrb[0].mxu0
  %v1161 = vadd.f32 %v1077, %v1160
  %v1162 = vpop.f32.mrb[0].mxu0
  %1163 = vdwg.mxu0
  %1164 = vmatprep.subr.mxu0 0.0
  %1165 = vmatpush1.msra.mxu0 %v1069
  %1166 = vmatprep.subr.mxu0 0.0
  %1167 = vmatpush1.msra.mxu0 %v1070
  %1168 = vmatprep.subr.mxu0 0.0
  %1169 = vmatpush1.msra.mxu0 0.0
  %1170 = vmatprep.subr.mxu0 0.0
  %1171 = vmatpush1.msra.mxu0 0.0
  %1172 = vmatprep.subr.mxu0 0.0
  %1173 = vmatpush1.msra.mxu0 0.0
  %1174 = vmatprep.subr.mxu0 0.0
  %1175 = vmatpush1.msra.mxu0 0.0
  %1176 = vmatprep.subr.mxu0 0.0
  %1177 = vmatpush1.msra.mxu0 0.0
  %1178 = vmatprep.subr.mxu0 0.0
  %1179 = vmatpush1.msra.mxu0 0.0
  %1180 = vmatprep.subr.mxu0 0.0
  %1181 = vmatpush1.msra.mxu0 0.0
  %1182 = vmatprep.subr.mxu0 0.0
  %1183 = vmatpush1.msra.mxu0 0.0
  %1184 = vmatprep.subr.mxu0 0.0
  %1185 = vmatpush1.msra.mxu0 0.0
  %1186 = vmatprep.subr.mxu0 0.0
  %1187 = vmatpush1.msra.mxu0 0.0
  %1188 = vmatprep.subr.mxu0 0.0
  %1189 = vmatpush1.msra.mxu0 0.0
  %1190 = vmatprep.subr.mxu0 0.0
  %1191 = vmatpush1.msra.mxu0 0.0
  %1192 = vmatprep.subr.mxu0 0.0
  %1193 = vmatpush1.msra.mxu0 0.0
  %1194 = vmatprep.subr.mxu0 0.0
  %1195 = vmatpush1.msra.mxu0 0.0
  %1196 = vmatprep.subr.mxu0 0.0
  %1197 = vmatpush1.msra.mxu0 0.0
  %1198 = vmatprep.subr.mxu0 0.0
  %1199 = vmatpush1.msra.mxu0 0.0
  %1200 = vmatprep.subr.mxu0 0.0
  %1201 = vmatpush1.msra.mxu0 0.0
  %1202 = vmatprep.subr.mxu0 0.0
  %1203 = vmatpush1.msra.mxu0 0.0
  %1204 = vmatprep.subr.mxu0 0.0
  %1205 = vmatpush1.msra.mxu0 0.0
  %1206 = vmatprep.subr.mxu0 0.0
  %1207 = vmatpush1.msra.mxu0 0.0
  %1208 = vmatprep.subr.mxu0 0.0
  %1209 = vmatpush1.msra.mxu0 0.0
  %1210 = vmatprep.subr.mxu0 0.0
  %1211 = vmatpush1.msra.mxu0 0.0
  %1212 = vmatprep.subr.mxu0 0.0
  %1213 = vmatpush1.msra.mxu0 0.0
  %1214 = vmatprep.subr.mxu0 0.0
  %1215 = vmatpush1.msra.mxu0 0.0
  %1216 = vmatprep.subr.mxu0 0.0
  %1217 = vmatpush1.msra.mxu0 0.0
  %1218 = vmatprep.subr.mxu0 0.0
  %1219 = vmatpush1.msra.mxu0 0.0
  %1220 = vmatprep.subr.mxu0 0.0
  %1221 = vmatpush1.msra.mxu0 0.0
  %1222 = vmatprep.subr.mxu0 0.0
  %1223 = vmatpush1.msra.mxu0 0.0
  %1224 = vmatprep.subr.mxu0 0.0
  %1225 = vmatpush1.msra.mxu0 0.0
  %1226 = vmatprep.subr.mxu0 0.0
  %1227 = vmatpush1.msra.mxu0 0.0
  %1228 = vmatprep.mubr.f32.mxu0 0.0
  %1229 = vmatmul.mubr.f32.gmra.mrb[0].mxu0 %v210
  %v1230 = vpop.f32.mrb[0].mxu0
  %v1231 = vadd.f32 0.0, %v1230
  %v1232 = vpop.f32.mrb[0].mxu0
  %1233 = vdwg.mxu0
  %v1234 = vadd.f32 %v1156, %v1231
  %v1235 = vxor.u32 %v1234, 2147483648
  %v1236 = vmul.f32 %v1235, 1.442695
  %v1237 = vpow.pop %v1236
  %v1238 = vadd.f32 %v1237, 1.0
  %v1239 = vrcp.pop %v1238
  %v1240 = vmul.f32 1.0, %v1239
  %v1241 = vmul.f32 %v1240, 2.0
  %v1242 = vsub.f32 %v1241, 1.0
  %v1243 = vmul.f32 %v1240, 0.0
  %1245 = vrot.lane.b32.xlu0 %v1242, 96
  %v1246 = vpop.permute.xlu0 %1245
  %v1248 = vmul.f32 %v1240, %v1246
  %1250 = vrot.lane.b32.xlu0 %v1248, 16
  %v1251 = vpop.permute.xlu0 %1250
  %v1253 = vadd.f32 %v1243, %v1251
  %v1254 = vtanh.pop %v1253
  %1256 = vrot.lane.b32.xlu0 %v1254, 32
  %v1257 = vpop.permute.xlu0 %1256
  %v1259 = vmul.f32 %v1240, %v1257
  %1261 = vrot.lane.b32.xlu0 %v1259, 80
  %v1262 = vpop.permute.xlu0 %1261
  %v1263 = vsel %vm127, %v1262, 0
  %1265 = vmatprep.subr.mxu0 0.0
  %1266 = vmatpush1.msra.mxu0 %v1069
  %1267 = vmatprep.subr.mxu0 0.0
  %1268 = vmatpush1.msra.mxu0 %v1070
  %1269 = vmatprep.subr.mxu0 0.0
  %1270 = vmatpush1.msra.mxu0 0.0
  %1271 = vmatprep.subr.mxu0 0.0
  %1272 = vmatpush1.msra.mxu0 0.0
  %1273 = vmatprep.subr.mxu0 0.0
  %1274 = vmatpush1.msra.mxu0 0.0
  %1275 = vmatprep.subr.mxu0 0.0
  %1276 = vmatpush1.msra.mxu0 0.0
  %1277 = vmatprep.subr.mxu0 0.0
  %1278 = vmatpush1.msra.mxu0 0.0
  %1279 = vmatprep.subr.mxu0 0.0
  %1280 = vmatpush1.msra.mxu0 0.0
  %1281 = vmatprep.subr.mxu0 0.0
  %1282 = vmatpush1.msra.mxu0 0.0
  %1283 = vmatprep.subr.mxu0 0.0
  %1284 = vmatpush1.msra.mxu0 0.0
  %1285 = vmatprep.subr.mxu0 0.0
  %1286 = vmatpush1.msra.mxu0 0.0
  %1287 = vmatprep.subr.mxu0 0.0
  %1288 = vmatpush1.msra.mxu0 0.0
  %1289 = vmatprep.subr.mxu0 0.0
  %1290 = vmatpush1.msra.mxu0 0.0
  %1291 = vmatprep.subr.mxu0 0.0
  %1292 = vmatpush1.msra.mxu0 0.0
  %1293 = vmatprep.subr.mxu0 0.0
  %1294 = vmatpush1.msra.mxu0 0.0
  %1295 = vmatprep.subr.mxu0 0.0
  %1296 = vmatpush1.msra.mxu0 0.0
  %1297 = vmatprep.subr.mxu0 0.0
  %1298 = vmatpush1.msra.mxu0 0.0
  %1299 = vmatprep.subr.mxu0 0.0
  %1300 = vmatpush1.msra.mxu0 0.0
  %1301 = vmatprep.subr.mxu0 0.0
  %1302 = vmatpush1.msra.mxu0 0.0
  %1303 = vmatprep.subr.mxu0 0.0
  %1304 = vmatpush1.msra.mxu0 0.0
  %1305 = vmatprep.subr.mxu0 0.0
  %1306 = vmatpush1.msra.mxu0 0.0
  %1307 = vmatprep.subr.mxu0 0.0
  %1308 = vmatpush1.msra.mxu0 0.0
  %1309 = vmatprep.subr.mxu0 0.0
  %1310 = vmatpush1.msra.mxu0 0.0
  %1311 = vmatprep.subr.mxu0 0.0
  %1312 = vmatpush1.msra.mxu0 0.0
  %1313 = vmatprep.subr.mxu0 0.0
  %1314 = vmatpush1.msra.mxu0 0.0
  %1315 = vmatprep.subr.mxu0 0.0
  %1316 = vmatpush1.msra.mxu0 0.0
  %1317 = vmatprep.subr.mxu0 0.0
  %1318 = vmatpush1.msra.mxu0 0.0
  %1319 = vmatprep.subr.mxu0 0.0
  %1320 = vmatpush1.msra.mxu0 0.0
  %1321 = vmatprep.subr.mxu0 0.0
  %1322 = vmatpush1.msra.mxu0 0.0
  %1323 = vmatprep.subr.mxu0 0.0
  %1324 = vmatpush1.msra.mxu0 0.0
  %1325 = vmatprep.subr.mxu0 0.0
  %1326 = vmatpush1.msra.mxu0 0.0
  %1327 = vmatprep.subr.mxu0 0.0
  %1328 = vmatpush1.msra.mxu0 0.0
  %1329 = vmatprep.mubr.f32.mxu0 0.0
  %1330 = vmatmul.mubr.f32.gmra.mrb[0].mxu0 %v1263
  %v1331 = vpop.f32.mrb[0].mxu0
  %v1332 = vadd.f32 0.0, %v1331
  %v1333 = vpop.f32.mrb[0].mxu0
  %1334 = vdwg.mxu0
  %v1336 = vrot.slane %v1332, 6
  %v1338 = vadd.f32 %v1156, %v1336
  %v1339 = vxor.u32 %v1338, 2147483648
  %v1340 = vmul.f32 %v1339, 1.442695
  %v1341 = vpow.pop %v1340
  %v1342 = vadd.f32 %v1341, 1.0
  %v1343 = vrcp.pop %v1342
  %v1344 = vmul.f32 1.0, %v1343
  %v1345 = vmul.f32 %v1344, 2.0
  %v1346 = vsub.f32 %v1345, 1.0
  %v1348 = vrot.slane %v1253, 6
  %v1350 = vmul.f32 %v1344, %v1348
  %1352 = vrot.lane.b32.xlu0 %v1346, 96
  %v1353 = vpop.permute.xlu0 %1352
  %v1355 = vmul.f32 %v1344, %v1353
  %1357 = vrot.lane.b32.xlu0 %v1355, 16
  %v1358 = vpop.permute.xlu0 %1357
  %v1360 = vadd.f32 %v1350, %v1358
  %v1361 = vtanh.pop %v1360
  %1363 = vrot.lane.b32.xlu0 %v1361, 32
  %v1364 = vpop.permute.xlu0 %1363
  %v1366 = vmul.f32 %v1344, %v1364
  %v1368 = vrot.slane %v1366, 2
  %1369 = vrot.lane.b32.xlu0 %v1368, 80
  %v1370 = vpop.permute.xlu0 %1369
  %v1371 = vsel %vm127, %v1370, 0
  %1373 = vmatprep.subr.mxu0 0.0
  %1374 = vmatpush1.msra.mxu0 %v1069
  %1375 = vmatprep.subr.mxu0 0.0
  %1376 = vmatpush1.msra.mxu0 %v1070
  %1377 = vmatprep.subr.mxu0 0.0
  %1378 = vmatpush1.msra.mxu0 0.0
  %1379 = vmatprep.subr.mxu0 0.0
  %1380 = vmatpush1.msra.mxu0 0.0
  %1381 = vmatprep.subr.mxu0 0.0
  %1382 = vmatpush1.msra.mxu0 0.0
  %1383 = vmatprep.subr.mxu0 0.0
  %1384 = vmatpush1.msra.mxu0 0.0
  %1385 = vmatprep.subr.mxu0 0.0
  %1386 = vmatpush1.msra.mxu0 0.0
  %1387 = vmatprep.subr.mxu0 0.0
  %1388 = vmatpush1.msra.mxu0 0.0
  %1389 = vmatprep.subr.mxu0 0.0
  %1390 = vmatpush1.msra.mxu0 0.0
  %1391 = vmatprep.subr.mxu0 0.0
  %1392 = vmatpush1.msra.mxu0 0.0
  %1393 = vmatprep.subr.mxu0 0.0
  %1394 = vmatpush1.msra.mxu0 0.0
  %1395 = vmatprep.subr.mxu0 0.0
  %1396 = vmatpush1.msra.mxu0 0.0
  %1397 = vmatprep.subr.mxu0 0.0
  %1398 = vmatpush1.msra.mxu0 0.0
  %1399 = vmatprep.subr.mxu0 0.0
  %1400 = vmatpush1.msra.mxu0 0.0
  %1401 = vmatprep.subr.mxu0 0.0
  %1402 = vmatpush1.msra.mxu0 0.0
  %1403 = vmatprep.subr.mxu0 0.0
  %1404 = vmatpush1.msra.mxu0 0.0
  %1405 = vmatprep.subr.mxu0 0.0
  %1406 = vmatpush1.msra.mxu0 0.0
  %1407 = vmatprep.subr.mxu0 0.0
  %1408 = vmatpush1.msra.mxu0 0.0
  %1409 = vmatprep.subr.mxu0 0.0
  %1410 = vmatpush1.msra.mxu0 0.0
  %1411 = vmatprep.subr.mxu0 0.0
  %1412 = vmatpush1.msra.mxu0 0.0
  %1413 = vmatprep.subr.mxu0 0.0
  %1414 = vmatpush1.msra.mxu0 0.0
  %1415 = vmatprep.subr.mxu0 0.0
  %1416 = vmatpush1.msra.mxu0 0.0
  %1417 = vmatprep.subr.mxu0 0.0
  %1418 = vmatpush1.msra.mxu0 0.0
  %1419 = vmatprep.subr.mxu0 0.0
  %1420 = vmatpush1.msra.mxu0 0.0
  %1421 = vmatprep.subr.mxu0 0.0
  %1422 = vmatpush1.msra.mxu0 0.0
  %1423 = vmatprep.subr.mxu0 0.0
  %1424 = vmatpush1.msra.mxu0 0.0
  %1425 = vmatprep.subr.mxu0 0.0
  %1426 = vmatpush1.msra.mxu0 0.0
  %1427 = vmatprep.subr.mxu0 0.0
  %1428 = vmatpush1.msra.mxu0 0.0
  %1429 = vmatprep.subr.mxu0 0.0
  %1430 = vmatpush1.msra.mxu0 0.0
  %1431 = vmatprep.subr.mxu0 0.0
  %1432 = vmatpush1.msra.mxu0 0.0
  %1433 = vmatprep.subr.mxu0 0.0
  %1434 = vmatpush1.msra.mxu0 0.0
  %1435 = vmatprep.subr.mxu0 0.0
  %1436 = vmatpush1.msra.mxu0 0.0
  %1437 = vmatprep.mubr.f32.mxu0 0.0
  %1438 = vmatmul.mubr.f32.gmra.mrb[0].mxu0 %v1371
  %v1439 = vpop.f32.mrb[0].mxu0
  %v1440 = vadd.f32 0.0, %v1439
  %v1441 = vpop.f32.mrb[0].mxu0
  %1442 = vdwg.mxu0
  %v1444 = vrot.slane %v1440, 4
  %v1446 = vadd.f32 %v1156, %v1444
  %v1447 = vxor.u32 %v1446, 2147483648
  %v1448 = vmul.f32 %v1447, 1.442695
  %v1449 = vpow.pop %v1448
  %v1450 = vadd.f32 %v1449, 1.0
  %v1451 = vrcp.pop %v1450
  %v1452 = vmul.f32 1.0, %v1451
  %v1453 = vmul.f32 %v1452, 2.0
  %v1454 = vsub.f32 %v1453, 1.0
  %v1456 = vrot.slane %v1360, 6
  %v1458 = vmul.f32 %v1452, %v1456
  %1460 = vrot.lane.b32.xlu0 %v1454, 96
  %v1461 = vpop.permute.xlu0 %1460
  %v1463 = vmul.f32 %v1452, %v1461
  %1465 = vrot.lane.b32.xlu0 %v1463, 16
  %v1466 = vpop.permute.xlu0 %1465
  %v1468 = vadd.f32 %v1458, %v1466
  %v1469 = vtanh.pop %v1468
  %1471 = vrot.lane.b32.xlu0 %v1469, 32
  %v1472 = vpop.permute.xlu0 %1471
  %v1474 = vmul.f32 %v1452, %v1472
  %v1476 = vrot.slane %v1474, 4
  %1477 = vrot.lane.b32.xlu0 %v1476, 80
  %v1478 = vpop.permute.xlu0 %1477
  %v1479 = vsel %vm127, %v1478, 0
  %1481 = vmatprep.subr.mxu0 0.0
  %1482 = vmatpush1.msra.mxu0 %v1069
  %1483 = vmatprep.subr.mxu0 0.0
  %1484 = vmatpush1.msra.mxu0 %v1070
  %1485 = vmatprep.subr.mxu0 0.0
  %1486 = vmatpush1.msra.mxu0 0.0
  %1487 = vmatprep.subr.mxu0 0.0
  %1488 = vmatpush1.msra.mxu0 0.0
  %1489 = vmatprep.subr.mxu0 0.0
  %1490 = vmatpush1.msra.mxu0 0.0
  %1491 = vmatprep.subr.mxu0 0.0
  %1492 = vmatpush1.msra.mxu0 0.0
  %1493 = vmatprep.subr.mxu0 0.0
  %1494 = vmatpush1.msra.mxu0 0.0
  %1495 = vmatprep.subr.mxu0 0.0
  %1496 = vmatpush1.msra.mxu0 0.0
  %1497 = vmatprep.subr.mxu0 0.0
  %1498 = vmatpush1.msra.mxu0 0.0
  %1499 = vmatprep.subr.mxu0 0.0
  %1500 = vmatpush1.msra.mxu0 0.0
  %1501 = vmatprep.subr.mxu0 0.0
  %1502 = vmatpush1.msra.mxu0 0.0
  %1503 = vmatprep.subr.mxu0 0.0
  %1504 = vmatpush1.msra.mxu0 0.0
  %1505 = vmatprep.subr.mxu0 0.0
  %1506 = vmatpush1.msra.mxu0 0.0
  %1507 = vmatprep.subr.mxu0 0.0
  %1508 = vmatpush1.msra.mxu0 0.0
  %1509 = vmatprep.subr.mxu0 0.0
  %1510 = vmatpush1.msra.mxu0 0.0
  %1511 = vmatprep.subr.mxu0 0.0
  %1512 = vmatpush1.msra.mxu0 0.0
  %1513 = vmatprep.subr.mxu0 0.0
  %1514 = vmatpush1.msra.mxu0 0.0
  %1515 = vmatprep.subr.mxu0 0.0
  %1516 = vmatpush1.msra.mxu0 0.0
  %1517 = vmatprep.subr.mxu0 0.0
  %1518 = vmatpush1.msra.mxu0 0.0
  %1519 = vmatprep.subr.mxu0 0.0
  %1520 = vmatpush1.msra.mxu0 0.0
  %1521 = vmatprep.subr.mxu0 0.0
  %1522 = vmatpush1.msra.mxu0 0.0
  %1523 = vmatprep.subr.mxu0 0.0
  %1524 = vmatpush1.msra.mxu0 0.0
  %1525 = vmatprep.subr.mxu0 0.0
  %1526 = vmatpush1.msra.mxu0 0.0
  %1527 = vmatprep.subr.mxu0 0.0
  %1528 = vmatpush1.msra.mxu0 0.0
  %1529 = vmatprep.subr.mxu0 0.0
  %1530 = vmatpush1.msra.mxu0 0.0
  %1531 = vmatprep.subr.mxu0 0.0
  %1532 = vmatpush1.msra.mxu0 0.0
  %1533 = vmatprep.subr.mxu0 0.0
  %1534 = vmatpush1.msra.mxu0 0.0
  %1535 = vmatprep.subr.mxu0 0.0
  %1536 = vmatpush1.msra.mxu0 0.0
  %1537 = vmatprep.subr.mxu0 0.0
  %1538 = vmatpush1.msra.mxu0 0.0
  %1539 = vmatprep.subr.mxu0 0.0
  %1540 = vmatpush1.msra.mxu0 0.0
  %1541 = vmatprep.subr.mxu0 0.0
  %1542 = vmatpush1.msra.mxu0 0.0
  %1543 = vmatprep.subr.mxu0 0.0
  %1544 = vmatpush1.msra.mxu0 0.0
  %1545 = vmatprep.mubr.f32.mxu0 0.0
  %1546 = vmatmul.mubr.f32.gmra.mrb[0].mxu0 %v1479
  %v1547 = vpop.f32.mrb[0].mxu0
  %v1548 = vadd.f32 0.0, %v1547
  %v1549 = vpop.f32.mrb[0].mxu0
  %1550 = vdwg.mxu0
  %v1552 = vrot.slane %v1548, 2
  %v1554 = vadd.f32 %v1156, %v1552
  %v1555 = vxor.u32 %v1554, 2147483648
  %v1556 = vmul.f32 %v1555, 1.442695
  %v1557 = vpow.pop %v1556
  %v1558 = vadd.f32 %v1557, 1.0
  %v1559 = vrcp.pop %v1558
  %v1560 = vmul.f32 1.0, %v1559
  %v1561 = vmul.f32 %v1560, 2.0
  %v1562 = vsub.f32 %v1561, 1.0
  %v1564 = vrot.slane %v1468, 6
  %v1566 = vmul.f32 %v1560, %v1564
  %1568 = vrot.lane.b32.xlu0 %v1562, 96
  %v1569 = vpop.permute.xlu0 %1568
  %v1571 = vmul.f32 %v1560, %v1569
  %1573 = vrot.lane.b32.xlu0 %v1571, 16
  %v1574 = vpop.permute.xlu0 %1573
  %v1576 = vadd.f32 %v1566, %v1574
  %v1577 = vtanh.pop %v1576
  %1579 = vrot.lane.b32.xlu0 %v1577, 32
  %v1580 = vpop.permute.xlu0 %1579
  %v1582 = vmul.f32 %v1560, %v1580
  %v1584 = vrot.slane %v1582, 6
  %1585 = vrot.lane.b32.xlu0 %v1584, 80
  %v1586 = vpop.permute.xlu0 %1585
  %v1587 = vsel %vm127, %v1586, 0
  %1589 = vmatprep.subr.mxu0 0.0
  %1590 = vmatpush1.msra.mxu0 %v1069
  %1591 = vmatprep.subr.mxu0 0.0
  %1592 = vmatpush1.msra.mxu0 %v1070
  %1593 = vmatprep.subr.mxu0 0.0
  %1594 = vmatpush1.msra.mxu0 0.0
  %1595 = vmatprep.subr.mxu0 0.0
  %1596 = vmatpush1.msra.mxu0 0.0
  %1597 = vmatprep.subr.mxu0 0.0
  %1598 = vmatpush1.msra.mxu0 0.0
  %1599 = vmatprep.subr.mxu0 0.0
  %1600 = vmatpush1.msra.mxu0 0.0
  %1601 = vmatprep.subr.mxu0 0.0
  %1602 = vmatpush1.msra.mxu0 0.0
  %1603 = vmatprep.subr.mxu0 0.0
  %1604 = vmatpush1.msra.mxu0 0.0
  %1605 = vmatprep.subr.mxu0 0.0
  %1606 = vmatpush1.msra.mxu0 0.0
  %1607 = vmatprep.subr.mxu0 0.0
  %1608 = vmatpush1.msra.mxu0 0.0
  %1609 = vmatprep.subr.mxu0 0.0
  %1610 = vmatpush1.msra.mxu0 0.0
  %1611 = vmatprep.subr.mxu0 0.0
  %1612 = vmatpush1.msra.mxu0 0.0
  %1613 = vmatprep.subr.mxu0 0.0
  %1614 = vmatpush1.msra.mxu0 0.0
  %1615 = vmatprep.subr.mxu0 0.0
  %1616 = vmatpush1.msra.mxu0 0.0
  %1617 = vmatprep.subr.mxu0 0.0
  %1618 = vmatpush1.msra.mxu0 0.0
  %1619 = vmatprep.subr.mxu0 0.0
  %1620 = vmatpush1.msra.mxu0 0.0
  %1621 = vmatprep.subr.mxu0 0.0
  %1622 = vmatpush1.msra.mxu0 0.0
  %1623 = vmatprep.subr.mxu0 0.0
  %1624 = vmatpush1.msra.mxu0 0.0
  %1625 = vmatprep.subr.mxu0 0.0
  %1626 = vmatpush1.msra.mxu0 0.0
  %1627 = vmatprep.subr.mxu0 0.0
  %1628 = vmatpush1.msra.mxu0 0.0
  %1629 = vmatprep.subr.mxu0 0.0
  %1630 = vmatpush1.msra.mxu0 0.0
  %1631 = vmatprep.subr.mxu0 0.0
  %1632 = vmatpush1.msra.mxu0 0.0
  %1633 = vmatprep.subr.mxu0 0.0
  %1634 = vmatpush1.msra.mxu0 0.0
  %1635 = vmatprep.subr.mxu0 0.0
  %1636 = vmatpush1.msra.mxu0 0.0
  %1637 = vmatprep.subr.mxu0 0.0
  %1638 = vmatpush1.msra.mxu0 0.0
  %1639 = vmatprep.subr.mxu0 0.0
  %1640 = vmatpush1.msra.mxu0 0.0
  %1641 = vmatprep.subr.mxu0 0.0
  %1642 = vmatpush1.msra.mxu0 0.0
  %1643 = vmatprep.subr.mxu0 0.0
  %1644 = vmatpush1.msra.mxu0 0.0
  %1645 = vmatprep.subr.mxu0 0.0
  %1646 = vmatpush1.msra.mxu0 0.0
  %1647 = vmatprep.subr.mxu0 0.0
  %1648 = vmatpush1.msra.mxu0 0.0
  %1649 = vmatprep.subr.mxu0 0.0
  %1650 = vmatpush1.msra.mxu0 0.0
  %1651 = vmatprep.subr.mxu0 0.0
  %1652 = vmatpush1.msra.mxu0 0.0
  %1653 = vmatprep.mubr.f32.mxu0 0.0
  %1654 = vmatmul.mubr.f32.gmra.mrb[0].mxu0 %v1587
  %v1655 = vpop.f32.mrb[0].mxu0
  %v1656 = vadd.f32 0.0, %v1655
  %v1657 = vpop.f32.mrb[0].mxu0
  %1658 = vdwg.mxu0
  %v1659 = vadd.f32 %v1161, %v1656
  %v1660 = vxor.u32 %v1659, 2147483648
  %v1661 = vmul.f32 %v1660, 1.442695
  %v1662 = vpow.pop %v1661
  %v1663 = vadd.f32 %v1662, 1.0
  %v1664 = vrcp.pop %v1663
  %v1665 = vmul.f32 1.0, %v1664
  %v1666 = vmul.f32 %v1665, 2.0
  %v1667 = vsub.f32 %v1666, 1.0
  %v1669 = vrot.slane %v1576, 6
  %v1671 = vmul.f32 %v1665, %v1669
  %1673 = vrot.lane.b32.xlu0 %v1667, 96
  %v1674 = vpop.permute.xlu0 %1673
  %v1676 = vmul.f32 %v1665, %v1674
  %1678 = vrot.lane.b32.xlu0 %v1676, 16
  %v1679 = vpop.permute.xlu0 %1678
  %v1681 = vadd.f32 %v1671, %v1679
  %v1682 = vtanh.pop %v1681
  %1684 = vrot.lane.b32.xlu0 %v1682, 32
  %v1685 = vpop.permute.xlu0 %1684
  %v1687 = vmul.f32 %v1665, %v1685
  %1689 = vrot.lane.b32.xlu0 %v1687, 80
  %v1690 = vpop.permute.xlu0 %1689
  %v1691 = vsel %vm127, %v1690, 0
  %1693 = vmatprep.subr.mxu0 0.0
  %1694 = vmatpush1.msra.mxu0 %v1069
  %1695 = vmatprep.subr.mxu0 0.0
  %1696 = vmatpush1.msra.mxu0 %v1070
  %1697 = vmatprep.subr.mxu0 0.0
  %1698 = vmatpush1.msra.mxu0 0.0
  %1699 = vmatprep.subr.mxu0 0.0
  %1700 = vmatpush1.msra.mxu0 0.0
  %1701 = vmatprep.subr.mxu0 0.0
  %1702 = vmatpush1.msra.mxu0 0.0
  %1703 = vmatprep.subr.mxu0 0.0
  %1704 = vmatpush1.msra.mxu0 0.0
  %1705 = vmatprep.subr.mxu0 0.0
  %1706 = vmatpush1.msra.mxu0 0.0
  %1707 = vmatprep.subr.mxu0 0.0
  %1708 = vmatpush1.msra.mxu0 0.0
  %1709 = vmatprep.subr.mxu0 0.0
  %1710 = vmatpush1.msra.mxu0 0.0
  %1711 = vmatprep.subr.mxu0 0.0
  %1712 = vmatpush1.msra.mxu0 0.0
  %1713 = vmatprep.subr.mxu0 0.0
  %1714 = vmatpush1.msra.mxu0 0.0
  %1715 = vmatprep.subr.mxu0 0.0
  %1716 = vmatpush1.msra.mxu0 0.0
  %1717 = vmatprep.subr.mxu0 0.0
  %1718 = vmatpush1.msra.mxu0 0.0
  %1719 = vmatprep.subr.mxu0 0.0
  %1720 = vmatpush1.msra.mxu0 0.0
  %1721 = vmatprep.subr.mxu0 0.0
  %1722 = vmatpush1.msra.mxu0 0.0
  %1723 = vmatprep.subr.mxu0 0.0
  %1724 = vmatpush1.msra.mxu0 0.0
  %1725 = vmatprep.subr.mxu0 0.0
  %1726 = vmatpush1.msra.mxu0 0.0
  %1727 = vmatprep.subr.mxu0 0.0
  %1728 = vmatpush1.msra.mxu0 0.0
  %1729 = vmatprep.subr.mxu0 0.0
  %1730 = vmatpush1.msra.mxu0 0.0
  %1731 = vmatprep.subr.mxu0 0.0
  %1732 = vmatpush1.msra.mxu0 0.0
  %1733 = vmatprep.subr.mxu0 0.0
  %1734 = vmatpush1.msra.mxu0 0.0
  %1735 = vmatprep.subr.mxu0 0.0
  %1736 = vmatpush1.msra.mxu0 0.0
  %1737 = vmatprep.subr.mxu0 0.0
  %1738 = vmatpush1.msra.mxu0 0.0
  %1739 = vmatprep.subr.mxu0 0.0
  %1740 = vmatpush1.msra.mxu0 0.0
  %1741 = vmatprep.subr.mxu0 0.0
  %1742 = vmatpush1.msra.mxu0 0.0
  %1743 = vmatprep.subr.mxu0 0.0
  %1744 = vmatpush1.msra.mxu0 0.0
  %1745 = vmatprep.subr.mxu0 0.0
  %1746 = vmatpush1.msra.mxu0 0.0
  %1747 = vmatprep.subr.mxu0 0.0
  %1748 = vmatpush1.msra.mxu0 0.0
  %1749 = vmatprep.subr.mxu0 0.0
  %1750 = vmatpush1.msra.mxu0 0.0
  %1751 = vmatprep.subr.mxu0 0.0
  %1752 = vmatpush1.msra.mxu0 0.0
  %1753 = vmatprep.subr.mxu0 0.0
  %1754 = vmatpush1.msra.mxu0 0.0
  %1755 = vmatprep.subr.mxu0 0.0
  %1756 = vmatpush1.msra.mxu0 0.0
  %1757 = vmatprep.mubr.f32.mxu0 0.0
  %1758 = vmatmul.mubr.f32.gmra.mrb[0].mxu0 %v1691
  %v1759 = vpop.f32.mrb[0].mxu0
  %v1760 = vadd.f32 0.0, %v1759
  %v1761 = vpop.f32.mrb[0].mxu0
  %1762 = vdwg.mxu0
  %v1764 = vrot.slane %v1760, 6
  %v1766 = vadd.f32 %v1161, %v1764
  %v1767 = vxor.u32 %v1766, 2147483648
  %v1768 = vmul.f32 %v1767, 1.442695
  %v1769 = vpow.pop %v1768
  %v1770 = vadd.f32 %v1769, 1.0
  %v1771 = vrcp.pop %v1770
  %v1772 = vmul.f32 1.0, %v1771
  %v1773 = vmul.f32 %v1772, 2.0
  %v1774 = vsub.f32 %v1773, 1.0
  %v1776 = vrot.slane %v1681, 6
  %v1778 = vmul.f32 %v1772, %v1776
  %1780 = vrot.lane.b32.xlu0 %v1774, 96
  %v1781 = vpop.permute.xlu0 %1780
  %v1783 = vmul.f32 %v1772, %v1781
  %1785 = vrot.lane.b32.xlu0 %v1783, 16
  %v1786 = vpop.permute.xlu0 %1785
  %v1788 = vadd.f32 %v1778, %v1786
  %v1789 = vtanh.pop %v1788
  %1791 = vrot.lane.b32.xlu0 %v1789, 32
  %v1792 = vpop.permute.xlu0 %1791
  %v1794 = vmul.f32 %v1772, %v1792
  %v1796 = vrot.slane %v1794, 2
  %1797 = vrot.lane.b32.xlu0 %v1796, 80
  %v1798 = vpop.permute.xlu0 %1797
  %v1799 = vsel %vm127, %v1798, 0
  %1801 = vmatprep.subr.mxu0 0.0
  %1802 = vmatpush1.msra.mxu0 %v1069
  %1803 = vmatprep.subr.mxu0 0.0
  %1804 = vmatpush1.msra.mxu0 %v1070
  %1805 = vmatprep.subr.mxu0 0.0
  %1806 = vmatpush1.msra.mxu0 0.0
  %1807 = vmatprep.subr.mxu0 0.0
  %1808 = vmatpush1.msra.mxu0 0.0
  %1809 = vmatprep.subr.mxu0 0.0
  %1810 = vmatpush1.msra.mxu0 0.0
  %1811 = vmatprep.subr.mxu0 0.0
  %1812 = vmatpush1.msra.mxu0 0.0
  %1813 = vmatprep.subr.mxu0 0.0
  %1814 = vmatpush1.msra.mxu0 0.0
  %1815 = vmatprep.subr.mxu0 0.0
  %1816 = vmatpush1.msra.mxu0 0.0
  %1817 = vmatprep.subr.mxu0 0.0
  %1818 = vmatpush1.msra.mxu0 0.0
  %1819 = vmatprep.subr.mxu0 0.0
  %1820 = vmatpush1.msra.mxu0 0.0
  %1821 = vmatprep.subr.mxu0 0.0
  %1822 = vmatpush1.msra.mxu0 0.0
  %1823 = vmatprep.subr.mxu0 0.0
  %1824 = vmatpush1.msra.mxu0 0.0
  %1825 = vmatprep.subr.mxu0 0.0
  %1826 = vmatpush1.msra.mxu0 0.0
  %1827 = vmatprep.subr.mxu0 0.0
  %1828 = vmatpush1.msra.mxu0 0.0
  %1829 = vmatprep.subr.mxu0 0.0
  %1830 = vmatpush1.msra.mxu0 0.0
  %1831 = vmatprep.subr.mxu0 0.0
  %1832 = vmatpush1.msra.mxu0 0.0
  %1833 = vmatprep.subr.mxu0 0.0
  %1834 = vmatpush1.msra.mxu0 0.0
  %1835 = vmatprep.subr.mxu0 0.0
  %1836 = vmatpush1.msra.mxu0 0.0
  %1837 = vmatprep.subr.mxu0 0.0
  %1838 = vmatpush1.msra.mxu0 0.0
  %1839 = vmatprep.subr.mxu0 0.0
  %1840 = vmatpush1.msra.mxu0 0.0
  %1841 = vmatprep.subr.mxu0 0.0
  %1842 = vmatpush1.msra.mxu0 0.0
  %1843 = vmatprep.subr.mxu0 0.0
  %1844 = vmatpush1.msra.mxu0 0.0
  %1845 = vmatprep.subr.mxu0 0.0
  %1846 = vmatpush1.msra.mxu0 0.0
  %1847 = vmatprep.subr.mxu0 0.0
  %1848 = vmatpush1.msra.mxu0 0.0
  %1849 = vmatprep.subr.mxu0 0.0
  %1850 = vmatpush1.msra.mxu0 0.0
  %1851 = vmatprep.subr.mxu0 0.0
  %1852 = vmatpush1.msra.mxu0 0.0
  %1853 = vmatprep.subr.mxu0 0.0
  %1854 = vmatpush1.msra.mxu0 0.0
  %1855 = vmatprep.subr.mxu0 0.0
  %1856 = vmatpush1.msra.mxu0 0.0
  %1857 = vmatprep.subr.mxu0 0.0
  %1858 = vmatpush1.msra.mxu0 0.0
  %1859 = vmatprep.subr.mxu0 0.0
  %1860 = vmatpush1.msra.mxu0 0.0
  %1861 = vmatprep.subr.mxu0 0.0
  %1862 = vmatpush1.msra.mxu0 0.0
  %1863 = vmatprep.subr.mxu0 0.0
  %1864 = vmatpush1.msra.mxu0 0.0
  %1865 = vmatprep.mubr.f32.mxu0 0.0
  %1866 = vmatmul.mubr.f32.gmra.mrb[0].mxu0 %v1799
  %v1867 = vpop.f32.mrb[0].mxu0
  %v1868 = vadd.f32 0.0, %v1867
  %v1869 = vpop.f32.mrb[0].mxu0
  %1870 = vdwg.mxu0
  %v1872 = vrot.slane %v1868, 4
  %v1874 = vadd.f32 %v1161, %v1872
  %v1875 = vxor.u32 %v1874, 2147483648
  %v1876 = vmul.f32 %v1875, 1.442695
  %v1877 = vpow.pop %v1876
  %v1878 = vadd.f32 %v1877, 1.0
  %v1879 = vrcp.pop %v1878
  %v1880 = vmul.f32 1.0, %v1879
  %v1881 = vmul.f32 %v1880, 2.0
  %v1882 = vsub.f32 %v1881, 1.0
  %v1884 = vrot.slane %v1788, 6
  %v1886 = vmul.f32 %v1880, %v1884
  %1888 = vrot.lane.b32.xlu0 %v1882, 96
  %v1889 = vpop.permute.xlu0 %1888
  %v1891 = vmul.f32 %v1880, %v1889
  %1893 = vrot.lane.b32.xlu0 %v1891, 16
  %v1894 = vpop.permute.xlu0 %1893
  %v1896 = vadd.f32 %v1886, %v1894
  %v1897 = vtanh.pop %v1896
  %1899 = vrot.lane.b32.xlu0 %v1897, 32
  %v1900 = vpop.permute.xlu0 %1899
  %v1902 = vmul.f32 %v1880, %v1900
  %v1904 = vrot.slane %v1902, 4
  %1905 = vrot.lane.b32.xlu0 %v1904, 80
  %v1906 = vpop.permute.xlu0 %1905
  %v1907 = vsel %vm127, %v1906, 0
  %1909 = vmatprep.subr.mxu0 0.0
  %1910 = vmatpush1.msra.mxu0 %v1069
  %1911 = vmatprep.subr.mxu0 0.0
  %1912 = vmatpush1.msra.mxu0 %v1070
  %1913 = vmatprep.subr.mxu0 0.0
  %1914 = vmatpush1.msra.mxu0 0.0
  %1915 = vmatprep.subr.mxu0 0.0
  %1916 = vmatpush1.msra.mxu0 0.0
  %1917 = vmatprep.subr.mxu0 0.0
  %1918 = vmatpush1.msra.mxu0 0.0
  %1919 = vmatprep.subr.mxu0 0.0
  %1920 = vmatpush1.msra.mxu0 0.0
  %1921 = vmatprep.subr.mxu0 0.0
  %1922 = vmatpush1.msra.mxu0 0.0
  %1923 = vmatprep.subr.mxu0 0.0
  %1924 = vmatpush1.msra.mxu0 0.0
  %1925 = vmatprep.subr.mxu0 0.0
  %1926 = vmatpush1.msra.mxu0 0.0
  %1927 = vmatprep.subr.mxu0 0.0
  %1928 = vmatpush1.msra.mxu0 0.0
  %1929 = vmatprep.subr.mxu0 0.0
  %1930 = vmatpush1.msra.mxu0 0.0
  %1931 = vmatprep.subr.mxu0 0.0
  %1932 = vmatpush1.msra.mxu0 0.0
  %1933 = vmatprep.subr.mxu0 0.0
  %1934 = vmatpush1.msra.mxu0 0.0
  %1935 = vmatprep.subr.mxu0 0.0
  %1936 = vmatpush1.msra.mxu0 0.0
  %1937 = vmatprep.subr.mxu0 0.0
  %1938 = vmatpush1.msra.mxu0 0.0
  %1939 = vmatprep.subr.mxu0 0.0
  %1940 = vmatpush1.msra.mxu0 0.0
  %1941 = vmatprep.subr.mxu0 0.0
  %1942 = vmatpush1.msra.mxu0 0.0
  %1943 = vmatprep.subr.mxu0 0.0
  %1944 = vmatpush1.msra.mxu0 0.0
  %1945 = vmatprep.subr.mxu0 0.0
  %1946 = vmatpush1.msra.mxu0 0.0
  %1947 = vmatprep.subr.mxu0 0.0
  %1948 = vmatpush1.msra.mxu0 0.0
  %1949 = vmatprep.subr.mxu0 0.0
  %1950 = vmatpush1.msra.mxu0 0.0
  %1951 = vmatprep.subr.mxu0 0.0
  %1952 = vmatpush1.msra.mxu0 0.0
  %1953 = vmatprep.subr.mxu0 0.0
  %1954 = vmatpush1.msra.mxu0 0.0
  %1955 = vmatprep.subr.mxu0 0.0
  %1956 = vmatpush1.msra.mxu0 0.0
  %1957 = vmatprep.subr.mxu0 0.0
  %1958 = vmatpush1.msra.mxu0 0.0
  %1959 = vmatprep.subr.mxu0 0.0
  %1960 = vmatpush1.msra.mxu0 0.0
  %1961 = vmatprep.subr.mxu0 0.0
  %1962 = vmatpush1.msra.mxu0 0.0
  %1963 = vmatprep.subr.mxu0 0.0
  %1964 = vmatpush1.msra.mxu0 0.0
  %1965 = vmatprep.subr.mxu0 0.0
  %1966 = vmatpush1.msra.mxu0 0.0
  %1967 = vmatprep.subr.mxu0 0.0
  %1968 = vmatpush1.msra.mxu0 0.0
  %1969 = vmatprep.subr.mxu0 0.0
  %1970 = vmatpush1.msra.mxu0 0.0
  %1971 = vmatprep.subr.mxu0 0.0
  %1972 = vmatpush1.msra.mxu0 0.0
  %1973 = vmatprep.mubr.f32.mxu0 0.0
  %1974 = vmatmul.mubr.f32.gmra.mrb[0].mxu0 %v1907
  %v1975 = vpop.f32.mrb[0].mxu0
  %v1976 = vadd.f32 0.0, %v1975
  %v1977 = vpop.f32.mrb[0].mxu0
  %1978 = vdwg.mxu0
  %v1980 = vrot.slane %v1976, 2
  %v1982 = vadd.f32 %v1161, %v1980
  %v1983 = vxor.u32 %v1982, 2147483648
  %v1984 = vmul.f32 %v1983, 1.442695
  %v1985 = vpow.pop %v1984
  %v1986 = vadd.f32 %v1985, 1.0
  %v1987 = vrcp.pop %v1986
  %v1988 = vmul.f32 1.0, %v1987
  %v1989 = vmul.f32 %v1988, 2.0
  %v1990 = vsub.f32 %v1989, 1.0
  %v1992 = vrot.slane %v1896, 6
  %v1994 = vmul.f32 %v1988, %v1992
  %1996 = vrot.lane.b32.xlu0 %v1990, 96
  %v1997 = vpop.permute.xlu0 %1996
  %v1999 = vmul.f32 %v1988, %v1997
  %2001 = vrot.lane.b32.xlu0 %v1999, 16
  %v2002 = vpop.permute.xlu0 %2001
  %v2004 = vadd.f32 %v1994, %v2002
  %v2005 = vtanh.pop %v2004
  %2007 = vrot.lane.b32.xlu0 %v2005, 32
  %v2008 = vpop.permute.xlu0 %2007
  %v2010 = vmul.f32 %v1988, %v2008
  %2012 = vrot.lane.b32.xlu0 %v1368, 96
  %v2013 = vpop.permute.xlu0 %2012
  %2015 = vrot.lane.b32.xlu0 %v1476, 112
  %v2016 = vpop.permute.xlu0 %2015
  %2019 = vrot.lane.b32.xlu0 %v1687, 16
  %v2020 = vpop.permute.xlu0 %2019
  %2022 = vrot.lane.b32.xlu0 %v1796, 32
  %v2023 = vpop.permute.xlu0 %2022
  %2025 = vrot.lane.b32.xlu0 %v1904, 48
  %v2026 = vpop.permute.xlu0 %2025
  %v2029 = vrot.slane %v2010, 6
  %2030 = vrot.lane.b32.xlu0 %v2029, 64
  %v2031 = vpop.permute.xlu0 %2030
  %v2033 = vsel %vm127, %v1262, %v2013
  %vm2034 = vcmask 261120
  %v2035 = vsel %vm2034, %v2033, %v2016
  %vm2036 = vcmask 392192
  %v2037 = vsel %vm2036, %v2035, %v1584
  %vm2038 = vcmask 523264
  %v2039 = vsel %vm2038, %v2037, %v2020
  %vm2040 = vcmask 654336
  %v2041 = vsel %vm2040, %v2039, %v2023
  %vm2042 = vcmask 785408
  %v2043 = vsel %vm2042, %v2041, %v2026
  %vm2044 = vcmask 916480
  %v2045 = vsel %vm2044, %v2043, %v2031
  %v2046 = vld [vmem:[%s4] sm:$0xff]
  %v2047 = vld [vmem:[%s4 + $0x8] sm:$0xff]
  %v2048 = vld [vmem:[%s4 + $0x10] sm:$0xff]
  %v2049 = vld [vmem:[%s4 + $0x18] sm:$0xff]
  %v2050 = vld [vmem:[%s4 + $0x20] sm:$0xff]
  %v2051 = vld [vmem:[%s4 + $0x28] sm:$0xff]
  %v2052 = vld [vmem:[%s4 + $0x30] sm:$0xff]
  %v2053 = vld [vmem:[%s4 + $0x38] sm:$0xff]
  %v2054 = vld [vmem:[%s4 + $0x40] sm:$0xff]
  %v2055 = vld [vmem:[%s4 + $0x48] sm:$0xff]
  %v2056 = vld [vmem:[%s4 + $0x50] sm:$0xff]
  %v2057 = vld [vmem:[%s4 + $0x58] sm:$0xff]
  %v2058 = vld [vmem:[%s4 + $0x60] sm:$0xff]
  %v2059 = vld [vmem:[%s4 + $0x68] sm:$0xff]
  %v2060 = vld [vmem:[%s4 + $0x70] sm:$0xff]
  %v2061 = vld [vmem:[%s4 + $0x78] sm:$0xff]
  %v2062 = vld [vmem:[%s5] sm:$0x1]
  %v2064 = vlaneseq
  %v2065 = vshrl.u32 %v2064, 7
  %v2066 = vsub.s32 0, %v2065
  %v2067 = vrot.slane %v2062, %v2066
  %2069 = vmatprep.subr.mxu0 0.0
  %2070 = vmatpush1.msra.mxu0 %v2046
  %2071 = vmatprep.subr.mxu0 0.0
  %2072 = vmatpush1.msra.mxu0 %v2047
  %2073 = vmatprep.subr.mxu0 0.0
  %2074 = vmatpush1.msra.mxu0 %v2048
  %2075 = vmatprep.subr.mxu0 0.0
  %2076 = vmatpush1.msra.mxu0 %v2049
  %2077 = vmatprep.subr.mxu0 0.0
  %2078 = vmatpush1.msra.mxu0 %v2050
  %2079 = vmatprep.subr.mxu0 0.0
  %2080 = vmatpush1.msra.mxu0 %v2051
  %2081 = vmatprep.subr.mxu0 0.0
  %2082 = vmatpush1.msra.mxu0 %v2052
  %2083 = vmatprep.subr.mxu0 0.0
  %2084 = vmatpush1.msra.mxu0 %v2053
  %2085 = vmatprep.subr.mxu0 0.0
  %2086 = vmatpush1.msra.mxu0 %v2054
  %2087 = vmatprep.subr.mxu0 0.0
  %2088 = vmatpush1.msra.mxu0 %v2055
  %2089 = vmatprep.subr.mxu0 0.0
  %2090 = vmatpush1.msra.mxu0 %v2056
  %2091 = vmatprep.subr.mxu0 0.0
  %2092 = vmatpush1.msra.mxu0 %v2057
  %2093 = vmatprep.subr.mxu0 0.0
  %2094 = vmatpush1.msra.mxu0 %v2058
  %2095 = vmatprep.subr.mxu0 0.0
  %2096 = vmatpush1.msra.mxu0 %v2059
  %2097 = vmatprep.subr.mxu0 0.0
  %2098 = vmatpush1.msra.mxu0 %v2060
  %2099 = vmatprep.subr.mxu0 0.0
  %2100 = vmatpush1.msra.mxu0 %v2061
  %2101 = vmatprep.subr.mxu0 0.0
  %2102 = vmatpush1.msra.mxu0 0.0
  %2103 = vmatprep.subr.mxu0 0.0
  %2104 = vmatpush1.msra.mxu0 0.0
  %2105 = vmatprep.subr.mxu0 0.0
  %2106 = vmatpush1.msra.mxu0 0.0
  %2107 = vmatprep.subr.mxu0 0.0
  %2108 = vmatpush1.msra.mxu0 0.0
  %2109 = vmatprep.subr.mxu0 0.0
  %2110 = vmatpush1.msra.mxu0 0.0
  %2111 = vmatprep.subr.mxu0 0.0
  %2112 = vmatpush1.msra.mxu0 0.0
  %2113 = vmatprep.subr.mxu0 0.0
  %2114 = vmatpush1.msra.mxu0 0.0
  %2115 = vmatprep.subr.mxu0 0.0
  %2116 = vmatpush1.msra.mxu0 0.0
  %2117 = vmatprep.subr.mxu0 0.0
  %2118 = vmatpush1.msra.mxu0 0.0
  %2119 = vmatprep.subr.mxu0 0.0
  %2120 = vmatpush1.msra.mxu0 0.0
  %2121 = vmatprep.subr.mxu0 0.0
  %2122 = vmatpush1.msra.mxu0 0.0
  %2123 = vmatprep.subr.mxu0 0.0
  %2124 = vmatpush1.msra.mxu0 0.0
  %2125 = vmatprep.subr.mxu0 0.0
  %2126 = vmatpush1.msra.mxu0 0.0
  %2127 = vmatprep.subr.mxu0 0.0
  %2128 = vmatpush1.msra.mxu0 0.0
  %2129 = vmatprep.subr.mxu0 0.0
  %2130 = vmatpush1.msra.mxu0 0.0
  %2131 = vmatprep.subr.mxu0 0.0
  %2132 = vmatpush1.msra.mxu0 0.0
  %2133 = vmatprep.mubr.f32.mxu0 0.0
  %2134 = vmatmul.mubr.f32.gmra.mrb[0].mxu0 %v2045
  %v2135 = vpop.f32.mrb[0].mxu0
  %v2136 = vadd.f32 %v2067, %v2135
  %v2137 = vpop.f32.mrb[0].mxu0
  %2138 = vdwg.mxu0
  %v2139 = vmax.f32 %v2136, 0.0
  %v2140 = vld [vmem:[%s6] sm:$0xff]
  %v2141 = vld [vmem:[%s6 + $0x8] sm:$0xff]
  %v2142 = vld [vmem:[%s6 + $0x10] sm:$0xff]
  %v2143 = vld [vmem:[%s6 + $0x18] sm:$0xff]
  %v2144 = vld [vmem:[%s7] sm:$0x1]
  %v2146 = vlaneseq
  %v2147 = vshrl.u32 %v2146, 7
  %v2148 = vsub.s32 0, %v2147
  %v2149 = vrot.slane %v2144, %v2148
  %v2152 = vsel %vm2034, %v2139, 0
  %2154 = vmatprep.subr.mxu0 0.0
  %2155 = vmatpush1.msra.mxu0 %v2140
  %2156 = vmatprep.subr.mxu0 0.0
  %2157 = vmatpush1.msra.mxu0 %v2141
  %2158 = vmatprep.subr.mxu0 0.0
  %2159 = vmatpush1.msra.mxu0 %v2142
  %2160 = vmatprep.subr.mxu0 0.0
  %2161 = vmatpush1.msra.mxu0 %v2143
  %2162 = vmatprep.subr.mxu0 0.0
  %2163 = vmatpush1.msra.mxu0 0.0
  %2164 = vmatprep.subr.mxu0 0.0
  %2165 = vmatpush1.msra.mxu0 0.0
  %2166 = vmatprep.subr.mxu0 0.0
  %2167 = vmatpush1.msra.mxu0 0.0
  %2168 = vmatprep.subr.mxu0 0.0
  %2169 = vmatpush1.msra.mxu0 0.0
  %2170 = vmatprep.subr.mxu0 0.0
  %2171 = vmatpush1.msra.mxu0 0.0
  %2172 = vmatprep.subr.mxu0 0.0
  %2173 = vmatpush1.msra.mxu0 0.0
  %2174 = vmatprep.subr.mxu0 0.0
  %2175 = vmatpush1.msra.mxu0 0.0
  %2176 = vmatprep.subr.mxu0 0.0
  %2177 = vmatpush1.msra.mxu0 0.0
  %2178 = vmatprep.subr.mxu0 0.0
  %2179 = vmatpush1.msra.mxu0 0.0
  %2180 = vmatprep.subr.mxu0 0.0
  %2181 = vmatpush1.msra.mxu0 0.0
  %2182 = vmatprep.subr.mxu0 0.0
  %2183 = vmatpush1.msra.mxu0 0.0
  %2184 = vmatprep.subr.mxu0 0.0
  %2185 = vmatpush1.msra.mxu0 0.0
  %2186 = vmatprep.subr.mxu0 0.0
  %2187 = vmatpush1.msra.mxu0 0.0
  %2188 = vmatprep.subr.mxu0 0.0
  %2189 = vmatpush1.msra.mxu0 0.0
  %2190 = vmatprep.subr.mxu0 0.0
  %2191 = vmatpush1.msra.mxu0 0.0
  %2192 = vmatprep.subr.mxu0 0.0
  %2193 = vmatpush1.msra.mxu0 0.0
  %2194 = vmatprep.subr.mxu0 0.0
  %2195 = vmatpush1.msra.mxu0 0.0
  %2196 = vmatprep.subr.mxu0 0.0
  %2197 = vmatpush1.msra.mxu0 0.0
  %2198 = vmatprep.subr.mxu0 0.0
  %2199 = vmatpush1.msra.mxu0 0.0
  %2200 = vmatprep.subr.mxu0 0.0
  %2201 = vmatpush1.msra.mxu0 0.0
  %2202 = vmatprep.subr.mxu0 0.0
  %2203 = vmatpush1.msra.mxu0 0.0
  %2204 = vmatprep.subr.mxu0 0.0
  %2205 = vmatpush1.msra.mxu0 0.0
  %2206 = vmatprep.subr.mxu0 0.0
  %2207 = vmatpush1.msra.mxu0 0.0
  %2208 = vmatprep.subr.mxu0 0.0
  %2209 = vmatpush1.msra.mxu0 0.0
  %2210 = vmatprep.subr.mxu0 0.0
  %2211 = vmatpush1.msra.mxu0 0.0
  %2212 = vmatprep.subr.mxu0 0.0
  %2213 = vmatpush1.msra.mxu0 0.0
  %2214 = vmatprep.subr.mxu0 0.0
  %2215 = vmatpush1.msra.mxu0 0.0
  %2216 = vmatprep.subr.mxu0 0.0
  %2217 = vmatpush1.msra.mxu0 0.0
  %2218 = vmatprep.mubr.f32.mxu0 0.0
  %2219 = vmatmul.mubr.f32.gmra.mrb[0].mxu0 %v2152
  %v2220 = vpop.f32.mrb[0].mxu0
  %v2221 = vadd.f32 %v2149, %v2220
  %v2222 = vpop.f32.mrb[0].mxu0
  %2223 = vdwg.mxu0
  %v2224 = vmax.f32 %v2221, 0.0
  %v2225 = vld [vmem:[%s8] sm:$0xff]
  %v2226 = vld [vmem:[%s8 + $0x8] sm:$0xff]
  %v2227 = vld [vmem:[%s9] sm:$0x1]
  %v2229 = vlaneseq
  %v2230 = vshrl.u32 %v2229, 7
  %v2231 = vsub.s32 0, %v2230
  %v2232 = vrot.slane %v2227, %v2231
  %v2235 = vsel %vm127, %v2224, 0
  %2237 = vmatprep.subr.mxu0 0.0
  %2238 = vmatpush1.msra.mxu0 %v2225
  %2239 = vmatprep.subr.mxu0 0.0
  %2240 = vmatpush1.msra.mxu0 %v2226
  %2241 = vmatprep.subr.mxu0 0.0
  %2242 = vmatpush1.msra.mxu0 0.0
  %2243 = vmatprep.subr.mxu0 0.0
  %2244 = vmatpush1.msra.mxu0 0.0
  %2245 = vmatprep.subr.mxu0 0.0
  %2246 = vmatpush1.msra.mxu0 0.0
  %2247 = vmatprep.subr.mxu0 0.0
  %2248 = vmatpush1.msra.mxu0 0.0
  %2249 = vmatprep.subr.mxu0 0.0
  %2250 = vmatpush1.msra.mxu0 0.0
  %2251 = vmatprep.subr.mxu0 0.0
  %2252 = vmatpush1.msra.mxu0 0.0
  %2253 = vmatprep.subr.mxu0 0.0
  %2254 = vmatpush1.msra.mxu0 0.0
  %2255 = vmatprep.subr.mxu0 0.0
  %2256 = vmatpush1.msra.mxu0 0.0
  %2257 = vmatprep.subr.mxu0 0.0
  %2258 = vmatpush1.msra.mxu0 0.0
  %2259 = vmatprep.subr.mxu0 0.0
  %2260 = vmatpush1.msra.mxu0 0.0
  %2261 = vmatprep.subr.mxu0 0.0
  %2262 = vmatpush1.msra.mxu0 0.0
  %2263 = vmatprep.subr.mxu0 0.0
  %2264 = vmatpush1.msra.mxu0 0.0
  %2265 = vmatprep.subr.mxu0 0.0
  %2266 = vmatpush1.msra.mxu0 0.0
  %2267 = vmatprep.subr.mxu0 0.0
  %2268 = vmatpush1.msra.mxu0 0.0
  %2269 = vmatprep.subr.mxu0 0.0
  %2270 = vmatpush1.msra.mxu0 0.0
  %2271 = vmatprep.subr.mxu0 0.0
  %2272 = vmatpush1.msra.mxu0 0.0
  %2273 = vmatprep.subr.mxu0 0.0
  %2274 = vmatpush1.msra.mxu0 0.0
  %2275 = vmatprep.subr.mxu0 0.0
  %2276 = vmatpush1.msra.mxu0 0.0
  %2277 = vmatprep.subr.mxu0 0.0
  %2278 = vmatpush1.msra.mxu0 0.0
  %2279 = vmatprep.subr.mxu0 0.0
  %2280 = vmatpush1.msra.mxu0 0.0
  %2281 = vmatprep.subr.mxu0 0.0
  %2282 = vmatpush1.msra.mxu0 0.0
  %2283 = vmatprep.subr.mxu0 0.0
  %2284 = vmatpush1.msra.mxu0 0.0
  %2285 = vmatprep.subr.mxu0 0.0
  %2286 = vmatpush1.msra.mxu0 0.0
  %2287 = vmatprep.subr.mxu0 0.0
  %2288 = vmatpush1.msra.mxu0 0.0
  %2289 = vmatprep.subr.mxu0 0.0
  %2290 = vmatpush1.msra.mxu0 0.0
  %2291 = vmatprep.subr.mxu0 0.0
  %2292 = vmatpush1.msra.mxu0 0.0
  %2293 = vmatprep.subr.mxu0 0.0
  %2294 = vmatpush1.msra.mxu0 0.0
  %2295 = vmatprep.subr.mxu0 0.0
  %2296 = vmatpush1.msra.mxu0 0.0
  %2297 = vmatprep.subr.mxu0 0.0
  %2298 = vmatpush1.msra.mxu0 0.0
  %2299 = vmatprep.subr.mxu0 0.0
  %2300 = vmatpush1.msra.mxu0 0.0
  %2301 = vmatprep.mubr.f32.mxu0 0.0
  %2302 = vmatmul.mubr.f32.gmra.mrb[0].mxu0 %v2235
  %v2303 = vpop.f32.mrb[0].mxu0
  %v2304 = vadd.f32 %v2232, %v2303
  %v2305 = vpop.f32.mrb[0].mxu0
  %2306 = vdwg.mxu0
  %v2307 = vmax.f32 %v2304, 0.0
  %v2308 = vld [vmem:[%s10] sm:$0xff]
  %v2309 = vld [vmem:[%s11] sm:$0x1]
  %v2311 = vlaneseq
  %v2312 = vshrl.u32 %v2311, 7
  %v2313 = vsub.s32 0, %v2312
  %v2314 = vrot.slane %v2309, %v2313
  %vm2316 = vcmask 64512
  %v2318 = vsel %vm2316, %v2307, 0
  %2320 = vmatprep.subr.mxu0 0.0
  %2321 = vmatpush1.msra.mxu0 %v2308
  %2322 = vmatprep.subr.mxu0 0.0
  %2323 = vmatpush1.msra.mxu0 0.0
  %2324 = vmatprep.subr.mxu0 0.0
  %2325 = vmatpush1.msra.mxu0 0.0
  %2326 = vmatprep.subr.mxu0 0.0
  %2327 = vmatpush1.msra.mxu0 0.0
  %2328 = vmatprep.subr.mxu0 0.0
  %2329 = vmatpush1.msra.mxu0 0.0
  %2330 = vmatprep.subr.mxu0 0.0
  %2331 = vmatpush1.msra.mxu0 0.0
  %2332 = vmatprep.subr.mxu0 0.0
  %2333 = vmatpush1.msra.mxu0 0.0
  %2334 = vmatprep.subr.mxu0 0.0
  %2335 = vmatpush1.msra.mxu0 0.0
  %2336 = vmatprep.subr.mxu0 0.0
  %2337 = vmatpush1.msra.mxu0 0.0
  %2338 = vmatprep.subr.mxu0 0.0
  %2339 = vmatpush1.msra.mxu0 0.0
  %2340 = vmatprep.subr.mxu0 0.0
  %2341 = vmatpush1.msra.mxu0 0.0
  %2342 = vmatprep.subr.mxu0 0.0
  %2343 = vmatpush1.msra.mxu0 0.0
  %2344 = vmatprep.subr.mxu0 0.0
  %2345 = vmatpush1.msra.mxu0 0.0
  %2346 = vmatprep.subr.mxu0 0.0
  %2347 = vmatpush1.msra.mxu0 0.0
  %2348 = vmatprep.subr.mxu0 0.0
  %2349 = vmatpush1.msra.mxu0 0.0
  %2350 = vmatprep.subr.mxu0 0.0
  %2351 = vmatpush1.msra.mxu0 0.0
  %2352 = vmatprep.subr.mxu0 0.0
  %2353 = vmatpush1.msra.mxu0 0.0
  %2354 = vmatprep.subr.mxu0 0.0
  %2355 = vmatpush1.msra.mxu0 0.0
  %2356 = vmatprep.subr.mxu0 0.0
  %2357 = vmatpush1.msra.mxu0 0.0
  %2358 = vmatprep.subr.mxu0 0.0
  %2359 = vmatpush1.msra.mxu0 0.0
  %2360 = vmatprep.subr.mxu0 0.0
  %2361 = vmatpush1.msra.mxu0 0.0
  %2362 = vmatprep.subr.mxu0 0.0
  %2363 = vmatpush1.msra.mxu0 0.0
  %2364 = vmatprep.subr.mxu0 0.0
  %2365 = vmatpush1.msra.mxu0 0.0
  %2366 = vmatprep.subr.mxu0 0.0
  %2367 = vmatpush1.msra.mxu0 0.0
  %2368 = vmatprep.subr.mxu0 0.0
  %2369 = vmatpush1.msra.mxu0 0.0
  %2370 = vmatprep.subr.mxu0 0.0
  %2371 = vmatpush1.msra.mxu0 0.0
  %2372 = vmatprep.subr.mxu0 0.0
  %2373 = vmatpush1.msra.mxu0 0.0
  %2374 = vmatprep.subr.mxu0 0.0
  %2375 = vmatpush1.msra.mxu0 0.0
  %2376 = vmatprep.subr.mxu0 0.0
  %2377 = vmatpush1.msra.mxu0 0.0
  %2378 = vmatprep.subr.mxu0 0.0
  %2379 = vmatpush1.msra.mxu0 0.0
  %2380 = vmatprep.subr.mxu0 0.0
  %2381 = vmatpush1.msra.mxu0 0.0
  %2382 = vmatprep.subr.mxu0 0.0
  %2383 = vmatpush1.msra.mxu0 0.0
  %2384 = vmatprep.mubr.f32.mxu0 0.0
  %2385 = vmatmul.mubr.f32.gmra.mrb[0].mxu0 %v2318
  %v2386 = vpop.f32.mrb[0].mxu0
  %v2387 = vadd.f32 %v2314, %v2386
  %v2388 = vpop.f32.mrb[0].mxu0
  %2389 = vdwg.mxu0
  %v2391 = vrot.slane %v1058, 6
  %2392 = vrot.lane.b32.xlu0 %v2391, 84
  %v2393 = vpop.permute.xlu0 %2392
  %v2396 = vrot.slane %v1052, 6
  %2397 = vrot.lane.b32.xlu0 %v2396, 4
  %v2398 = vpop.permute.xlu0 %2397
  %2400 = vrot.lane.b32.xlu0 %v2029, 116
  %v2401 = vpop.permute.xlu0 %2400
  %v2404 = vrot.slane %v2004, 6
  %2405 = vrot.lane.b32.xlu0 %v2404, 36
  %v2406 = vpop.permute.xlu0 %2405
  %vm2408 = vcmask 31744
  %v2409 = vsel %vm2408, %v2387, %v2393
  %vm2410 = vcmask 162816
  %v2411 = vsel %vm2410, %v2409, %v2398
  %vm2412 = vcmask 293888
  %v2413 = vsel %vm2412, %v2411, %v2401
  %vm2414 = vcmask 424960
  %v2415 = vsel %vm2414, %v2413, %v2406
  %vm2416 = vcmask 549888
  %2417 = vst.msk [vmem:[%s12] sm:$0x3] %vm2416, %v2415
  // Predicated region
  $region50: #{lstm_direct_forward.1} parent=0 // pred_check
    _
  $region51: #{lstm_direct_forward.1} parent=0 // pred_check_branch
    %2419 = sbr.rel (0) target = $region53
  $region52: #{lstm_direct_forward.1} parent=0 // pred_region
    _
  $region53: #{lstm_direct_forward.1} parent=0 // pred_fallthru
    _
  // Predicated region
  $region54: #{lstm_direct_forward.1} parent=0 // pred_check
    _
  $region55: #{lstm_direct_forward.1} parent=0 // pred_check_branch
    %2421 = sbr.rel (0) target = $region57
  $region56: #{lstm_direct_forward.1} parent=0 // pred_region
    _
  $region57: #{lstm_direct_forward.1} parent=0 // pred_fallthru
    _

</llo_original>
